<compile_context>
chip_gen: v5e
topology: v5e:2x2
jax: 0.10.0
libtpu: 0.0.40
codegen_flags: <defaults>
</compile_context>

<pallas_src>
import jax
import jax.numpy as jnp
from jax import lax
from jax.experimental import pallas as pl
from jax.experimental.pallas import tpu as pltpu

BT = 8            # images per grid step (sublane-aligned); raise to 32/64 for big batches
POOL_S = 14 * 14  # 196 pooled pixels per image
CONV_K = 9        # 3x3 conv taps


def convnet_kernel(patches_ref, wc_ref, bc_ref, wlr_ref, bl_ref, out_ref):
    """Fused conv+ReLU+maxpool+flatten+linear for one tile of BT images.

    patches_ref: (BT, 9, 4*196) bf16  im2col patches, lane = pool_pos*196 + pixel
    wc_ref:      (C, 9)         f32   conv weight, tap-major (dy*3+dx)
    bc_ref:      (C, 1)         f32   conv bias
    wlr_ref:     (C, 196, 10)   f32   linear weight, wlr[c, s, k] = wl[k, c*196 + s]
    bl_ref:      (1, 10)        f32   linear bias
    out_ref:     (BT, 10)       f32   logits
    """
    bt = patches_ref.shape[0]
    n_ch = wc_ref.shape[0]
    s = POOL_S

    wc = wc_ref[...]
    bc = bc_ref[...]

    # ---- stage 1: conv (one matmul per image) + pool-max + bias + ReLU ------
    pooled = []
    for b in range(bt):
        pat = patches_ref[b].astype(jnp.float32)                       # (9, 784)
        acc = jnp.dot(wc, pat, preferred_element_type=jnp.float32)     # (C, 784)
        # 2x2 max-pool == max over the 4 contiguous lane chunks (pool positions)
        m = jnp.maximum(jnp.maximum(acc[:, 0 * s:1 * s], acc[:, 1 * s:2 * s]),
                        jnp.maximum(acc[:, 2 * s:3 * s], acc[:, 3 * s:4 * s]))
        # bias + ReLU applied once, after the max (monotone => same result)
        pooled.append(jnp.maximum(m + bc, 0.0))                        # (C, 196) f32

    # ---- stage 2: fused Linear, accumulated channel by channel --------------
    out_acc = jnp.zeros((bt, 10), jnp.float32)
    for c in range(n_ch):
        lhs_c = jnp.concatenate([p[c:c + 1, :] for p in pooled], axis=0)   # (BT, 196)
        out_acc = out_acc + jnp.dot(lhs_c, wlr_ref[c],
                                    preferred_element_type=jnp.float32)    # (BT, 10)
    out_ref[...] = out_acc + bl_ref[...]


def convnet_forward(x, params):
    """Forward pass of ConvNet(channels=C) on (N, 1, 28, 28) inputs (NCHW)."""
    wc, bc, wl, bl = params        # torch-shaped parameters
    n = x.shape[0]
    ch = wc.shape[0]
    assert x.shape == (n, 1, 28, 28)

    # ---- glue: zero-pad + im2col with pool-position-major lanes, in bf16 ----
    xp = jnp.pad(x[:, 0], ((0, 0), (1, 1), (1, 1))).astype(jnp.bfloat16)   # (N, 30, 30)
    chunks = []
    for di in range(2):            # pool position (di, dj)
        for dj in range(2):
            taps = []
            for dy in range(3):    # conv tap (dy, dx)
                for dx in range(3):
                    sl = xp[:, di + dy: di + dy + 28: 2,
                            dj + dx: dj + dx + 28: 2]                      # (N, 14, 14)
                    taps.append(sl.reshape(n, POOL_S))
            chunks.append(jnp.stack(taps, axis=1))                         # (N, 9, 196)
    patches = jnp.concatenate(chunks, axis=-1)                             # (N, 9, 784)

    pad_n = -n % BT
    if pad_n:
        patches = jnp.pad(patches, ((0, pad_n), (0, 0), (0, 0)))
    n_pad = n + pad_n
    num_tiles = n_pad // BT

    # weight permutations (tiny; hoisted/folded under jit)
    wc_k = wc.reshape(ch, CONV_K).astype(jnp.float32)                      # (C, 9)
    bc_k = bc.reshape(ch, 1).astype(jnp.float32)                           # (C, 1)
    wlr = jnp.transpose(wl.reshape(10, ch, POOL_S), (1, 2, 0)).astype(jnp.float32)  # (C,196,10)
    bl_k = bl.reshape(1, 10).astype(jnp.float32)                           # (1, 10)

    out = pl.pallas_call(
        convnet_kernel,
        out_shape=jax.ShapeDtypeStruct((n_pad, 10), jnp.float32),
        grid_spec=pltpu.PrefetchScalarGridSpec(
            num_scalar_prefetch=0,
            grid=(num_tiles,),
            in_specs=[
                pl.BlockSpec((BT, CONV_K, 4 * POOL_S), lambda i: (i, 0, 0)),
                pl.BlockSpec((ch, CONV_K), lambda i: (0, 0)),
                pl.BlockSpec((ch, 1), lambda i: (0, 0)),
                pl.BlockSpec((ch, POOL_S, 10), lambda i: (0, 0, 0)),
                pl.BlockSpec((1, 10), lambda i: (0, 0)),
            ],
            out_specs=pl.BlockSpec((BT, 10), lambda i: (i, 0)),
        ),
        compiler_params=pltpu.CompilerParams(
            dimension_semantics=("parallel",)),   # batch tiles shard across TCs (v7x)
    )(patches, wc_k, bc_k, wlr, bl_k)
    return out[:n]


def init_params(key, channels):
    """Deterministic init with the torch module's parameter shapes (kaiming-uniform-ish)."""
    k1, k2, k3, k4 = jax.random.split(key, 4)
    fan_in_conv = 1 * 3 * 3
    bound_c = 1.0 / (fan_in_conv ** 0.5)
    wc = jax.random.uniform(k1, (channels, 1, 3, 3), jnp.float32, -bound_c, bound_c)
    bc = jax.random.uniform(k2, (channels,), jnp.float32, -bound_c, bound_c)
    fan_in_lin = channels * 14 * 14
    bound_l = 1.0 / (fan_in_lin ** 0.5)
    wl = jax.random.uniform(k3, (10, fan_in_lin), jnp.float32, -bound_l, bound_l)
    bl = jax.random.uniform(k4, (10,), jnp.float32, -bound_l, bound_l)
    return wc, bc, wl, bl


def reference_forward(x, params):
    """Pure-JAX reference replicating the PyTorch forward (NCHW)."""
    wc, bc, wl, bl = params
    conv = lax.conv_general_dilated(
        x, wc, window_strides=(1, 1), padding="SAME",
        dimension_numbers=("NCHW", "OIHW", "NCHW"),
        precision=lax.Precision.HIGHEST)
    conv = jnp.maximum(conv + bc[None, :, None, None], 0.0)
    pooled = lax.reduce_window(conv, -jnp.inf, lax.max,
                               (1, 1, 2, 2), (1, 1, 2, 2), "VALID")
    feat = pooled.reshape(x.shape[0], -1)       # torch Flatten order (c*196 + i*14 + j)
    return feat @ wl.T + bl


if __name__ == "__main__":
    key = jax.random.PRNGKey(0)
    kx, kp = jax.random.split(key)
    # 28x28 single-channel input is forced by Flatten -> Linear(channels*14*14, 10).
    N, C = 2, 8
    x = jax.random.normal(kx, (N, 1, 28, 28), jnp.float32)
    params = init_params(kp, C)

    fwd = jax.jit(convnet_forward)
    out = jax.block_until_ready(fwd(x, params))
    assert out.shape == (N, 10) and out.dtype == jnp.float32

    ref = reference_forward(x, params)
    assert jnp.allclose(out, ref, atol=1e-2, rtol=1e-2), (out, ref)
    print("KERNEL_OK")
</pallas_src>

<mosaic_0001>
module attributes {stable_mosaic.version = 11 : i64} {
  func.func @convnet_kernel(%arg0: i32, %arg1: memref<8x9x784xbf16, #tpu.memory_space<vmem>>, %arg2: memref<8x9xf32, #tpu.memory_space<vmem>>, %arg3: memref<8x1xf32, #tpu.memory_space<vmem>>, %arg4: memref<8x196x10xf32, #tpu.memory_space<vmem>>, %arg5: memref<1x10xf32, #tpu.memory_space<vmem>>, %arg6: memref<8x10xf32, #tpu.memory_space<vmem>>) attributes {dimension_semantics = [#tpu.dimension_semantics<parallel>], iteration_bounds = array<i64: 1>, scalar_prefetch = 0 : i64, scratch_operands = 0 : i64, tpu.core_type = #tpu.core_type<tc>, window_params = [{transform_indices = @transform_0, window_bounds = array<i64: 8, 9, 784>}, {pipeline_mode = #tpu.pipeline_mode<synchronous>, transform_indices = @transform_1, window_bounds = array<i64: 8, 9>}, {pipeline_mode = #tpu.pipeline_mode<synchronous>, transform_indices = @transform_2, window_bounds = array<i64: 8, 1>}, {pipeline_mode = #tpu.pipeline_mode<synchronous>, transform_indices = @transform_3, window_bounds = array<i64: 8, 196, 10>}, {pipeline_mode = #tpu.pipeline_mode<synchronous>, transform_indices = @transform_4, window_bounds = array<i64: 1, 10>}, {transform_indices = @transform_5, window_bounds = array<i64: 8, 10>}]} {
    %c0 = arith.constant 0 : index
    %c0_0 = arith.constant 0 : index
    %0 = vector.load %arg2[%c0, %c0_0] : memref<8x9xf32, #tpu.memory_space<vmem>>, vector<8x9xf32>
    %c0_1 = arith.constant 0 : index
    %c0_2 = arith.constant 0 : index
    %1 = vector.load %arg3[%c0_1, %c0_2] : memref<8x1xf32, #tpu.memory_space<vmem>>, vector<8x1xf32>
    %c0_3 = arith.constant 0 : index
    %c0_4 = arith.constant 0 : index
    %c0_5 = arith.constant 0 : index
    %2 = vector.load %arg1[%c0_3, %c0_4, %c0_5] : memref<8x9x784xbf16, #tpu.memory_space<vmem>>, vector<1x9x784xbf16>
    %3 = vector.shape_cast %2 : vector<1x9x784xbf16> to vector<9x784xbf16>
    %4 = arith.extf %3 : vector<9x784xbf16> to vector<9x784xf32>
    %cst = arith.constant dense<0.000000e+00> : vector<8x784xf32>
    %5 = tpu.matmul %0, %4, %cst {dimension_numbers = #tpu.dot_dimension_numbers<[1], [0], [0], [1], [0, 0, 1, 1], [], []>} : vector<8x9xf32>, vector<9x784xf32>, vector<8x784xf32> -> vector<8x784xf32>
    %6 = vector.extract_strided_slice %5 {offsets = [0, 0], sizes = [8, 196], strides = [1, 1]} : vector<8x784xf32> to vector<8x196xf32>
    %7 = vector.extract_strided_slice %5 {offsets = [0, 196], sizes = [8, 196], strides = [1, 1]} : vector<8x784xf32> to vector<8x196xf32>
    %8 = arith.maximumf %6, %7 : vector<8x196xf32>
    %9 = vector.extract_strided_slice %5 {offsets = [0, 392], sizes = [8, 196], strides = [1, 1]} : vector<8x784xf32> to vector<8x196xf32>
    %10 = vector.extract_strided_slice %5 {offsets = [0, 588], sizes = [8, 196], strides = [1, 1]} : vector<8x784xf32> to vector<8x196xf32>
    %11 = arith.maximumf %9, %10 : vector<8x196xf32>
    %12 = arith.maximumf %8, %11 : vector<8x196xf32>
    %13 = vector.broadcast %1 : vector<8x1xf32> to vector<8x196xf32>
    %14 = arith.addf %12, %13 : vector<8x196xf32>
    %cst_6 = arith.constant 0.000000e+00 : f32
    %15 = vector.broadcast %cst_6 : f32 to vector<8x196xf32>
    %16 = arith.maximumf %14, %15 : vector<8x196xf32>
    %c1 = arith.constant 1 : index
    %c0_7 = arith.constant 0 : index
    %c0_8 = arith.constant 0 : index
    %17 = vector.load %arg1[%c1, %c0_7, %c0_8] : memref<8x9x784xbf16, #tpu.memory_space<vmem>>, vector<1x9x784xbf16>
    %18 = vector.shape_cast %17 : vector<1x9x784xbf16> to vector<9x784xbf16>
    %19 = arith.extf %18 : vector<9x784xbf16> to vector<9x784xf32>
    %cst_9 = arith.constant dense<0.000000e+00> : vector<8x784xf32>
    %20 = tpu.matmul %0, %19, %cst_9 {dimension_numbers = #tpu.dot_dimension_numbers<[1], [0], [0], [1], [0, 0, 1, 1], [], []>} : vector<8x9xf32>, vector<9x784xf32>, vector<8x784xf32> -> vector<8x784xf32>
    %21 = vector.extract_strided_slice %20 {offsets = [0, 0], sizes = [8, 196], strides = [1, 1]} : vector<8x784xf32> to vector<8x196xf32>
    %22 = vector.extract_strided_slice %20 {offsets = [0, 196], sizes = [8, 196], strides = [1, 1]} : vector<8x784xf32> to vector<8x196xf32>
    %23 = arith.maximumf %21, %22 : vector<8x196xf32>
    %24 = vector.extract_strided_slice %20 {offsets = [0, 392], sizes = [8, 196], strides = [1, 1]} : vector<8x784xf32> to vector<8x196xf32>
    %25 = vector.extract_strided_slice %20 {offsets = [0, 588], sizes = [8, 196], strides = [1, 1]} : vector<8x784xf32> to vector<8x196xf32>
    %26 = arith.maximumf %24, %25 : vector<8x196xf32>
    %27 = arith.maximumf %23, %26 : vector<8x196xf32>
    %28 = vector.broadcast %1 : vector<8x1xf32> to vector<8x196xf32>
    %29 = arith.addf %27, %28 : vector<8x196xf32>
    %cst_10 = arith.constant 0.000000e+00 : f32
    %30 = vector.broadcast %cst_10 : f32 to vector<8x196xf32>
    %31 = arith.maximumf %29, %30 : vector<8x196xf32>
    %c2 = arith.constant 2 : index
    %c0_11 = arith.constant 0 : index
    %c0_12 = arith.constant 0 : index
    %32 = vector.load %arg1[%c2, %c0_11, %c0_12] : memref<8x9x784xbf16, #tpu.memory_space<vmem>>, vector<1x9x784xbf16>
    %33 = vector.shape_cast %32 : vector<1x9x784xbf16> to vector<9x784xbf16>
    %34 = arith.extf %33 : vector<9x784xbf16> to vector<9x784xf32>
    %cst_13 = arith.constant dense<0.000000e+00> : vector<8x784xf32>
    %35 = tpu.matmul %0, %34, %cst_13 {dimension_numbers = #tpu.dot_dimension_numbers<[1], [0], [0], [1], [0, 0, 1, 1], [], []>} : vector<8x9xf32>, vector<9x784xf32>, vector<8x784xf32> -> vector<8x784xf32>
    %36 = vector.extract_strided_slice %35 {offsets = [0, 0], sizes = [8, 196], strides = [1, 1]} : vector<8x784xf32> to vector<8x196xf32>
    %37 = vector.extract_strided_slice %35 {offsets = [0, 196], sizes = [8, 196], strides = [1, 1]} : vector<8x784xf32> to vector<8x196xf32>
    %38 = arith.maximumf %36, %37 : vector<8x196xf32>
    %39 = vector.extract_strided_slice %35 {offsets = [0, 392], sizes = [8, 196], strides = [1, 1]} : vector<8x784xf32> to vector<8x196xf32>
    %40 = vector.extract_strided_slice %35 {offsets = [0, 588], sizes = [8, 196], strides = [1, 1]} : vector<8x784xf32> to vector<8x196xf32>
    %41 = arith.maximumf %39, %40 : vector<8x196xf32>
    %42 = arith.maximumf %38, %41 : vector<8x196xf32>
    %43 = vector.broadcast %1 : vector<8x1xf32> to vector<8x196xf32>
    %44 = arith.addf %42, %43 : vector<8x196xf32>
    %cst_14 = arith.constant 0.000000e+00 : f32
    %45 = vector.broadcast %cst_14 : f32 to vector<8x196xf32>
    %46 = arith.maximumf %44, %45 : vector<8x196xf32>
    %c3 = arith.constant 3 : index
    %c0_15 = arith.constant 0 : index
    %c0_16 = arith.constant 0 : index
    %47 = vector.load %arg1[%c3, %c0_15, %c0_16] : memref<8x9x784xbf16, #tpu.memory_space<vmem>>, vector<1x9x784xbf16>
    %48 = vector.shape_cast %47 : vector<1x9x784xbf16> to vector<9x784xbf16>
    %49 = arith.extf %48 : vector<9x784xbf16> to vector<9x784xf32>
    %cst_17 = arith.constant dense<0.000000e+00> : vector<8x784xf32>
    %50 = tpu.matmul %0, %49, %cst_17 {dimension_numbers = #tpu.dot_dimension_numbers<[1], [0], [0], [1], [0, 0, 1, 1], [], []>} : vector<8x9xf32>, vector<9x784xf32>, vector<8x784xf32> -> vector<8x784xf32>
    %51 = vector.extract_strided_slice %50 {offsets = [0, 0], sizes = [8, 196], strides = [1, 1]} : vector<8x784xf32> to vector<8x196xf32>
    %52 = vector.extract_strided_slice %50 {offsets = [0, 196], sizes = [8, 196], strides = [1, 1]} : vector<8x784xf32> to vector<8x196xf32>
    %53 = arith.maximumf %51, %52 : vector<8x196xf32>
    %54 = vector.extract_strided_slice %50 {offsets = [0, 392], sizes = [8, 196], strides = [1, 1]} : vector<8x784xf32> to vector<8x196xf32>
    %55 = vector.extract_strided_slice %50 {offsets = [0, 588], sizes = [8, 196], strides = [1, 1]} : vector<8x784xf32> to vector<8x196xf32>
    %56 = arith.maximumf %54, %55 : vector<8x196xf32>
    %57 = arith.maximumf %53, %56 : vector<8x196xf32>
    %58 = vector.broadcast %1 : vector<8x1xf32> to vector<8x196xf32>
    %59 = arith.addf %57, %58 : vector<8x196xf32>
    %cst_18 = arith.constant 0.000000e+00 : f32
    %60 = vector.broadcast %cst_18 : f32 to vector<8x196xf32>
    %61 = arith.maximumf %59, %60 : vector<8x196xf32>
    %c4 = arith.constant 4 : index
    %c0_19 = arith.constant 0 : index
    %c0_20 = arith.constant 0 : index
    %62 = vector.load %arg1[%c4, %c0_19, %c0_20] : memref<8x9x784xbf16, #tpu.memory_space<vmem>>, vector<1x9x784xbf16>
    %63 = vector.shape_cast %62 : vector<1x9x784xbf16> to vector<9x784xbf16>
    %64 = arith.extf %63 : vector<9x784xbf16> to vector<9x784xf32>
    %cst_21 = arith.constant dense<0.000000e+00> : vector<8x784xf32>
    %65 = tpu.matmul %0, %64, %cst_21 {dimension_numbers = #tpu.dot_dimension_numbers<[1], [0], [0], [1], [0, 0, 1, 1], [], []>} : vector<8x9xf32>, vector<9x784xf32>, vector<8x784xf32> -> vector<8x784xf32>
    %66 = vector.extract_strided_slice %65 {offsets = [0, 0], sizes = [8, 196], strides = [1, 1]} : vector<8x784xf32> to vector<8x196xf32>
    %67 = vector.extract_strided_slice %65 {offsets = [0, 196], sizes = [8, 196], strides = [1, 1]} : vector<8x784xf32> to vector<8x196xf32>
    %68 = arith.maximumf %66, %67 : vector<8x196xf32>
    %69 = vector.extract_strided_slice %65 {offsets = [0, 392], sizes = [8, 196], strides = [1, 1]} : vector<8x784xf32> to vector<8x196xf32>
    %70 = vector.extract_strided_slice %65 {offsets = [0, 588], sizes = [8, 196], strides = [1, 1]} : vector<8x784xf32> to vector<8x196xf32>
    %71 = arith.maximumf %69, %70 : vector<8x196xf32>
    %72 = arith.maximumf %68, %71 : vector<8x196xf32>
    %73 = vector.broadcast %1 : vector<8x1xf32> to vector<8x196xf32>
    %74 = arith.addf %72, %73 : vector<8x196xf32>
    %cst_22 = arith.constant 0.000000e+00 : f32
    %75 = vector.broadcast %cst_22 : f32 to vector<8x196xf32>
    %76 = arith.maximumf %74, %75 : vector<8x196xf32>
    %c5 = arith.constant 5 : index
    %c0_23 = arith.constant 0 : index
    %c0_24 = arith.constant 0 : index
    %77 = vector.load %arg1[%c5, %c0_23, %c0_24] : memref<8x9x784xbf16, #tpu.memory_space<vmem>>, vector<1x9x784xbf16>
    %78 = vector.shape_cast %77 : vector<1x9x784xbf16> to vector<9x784xbf16>
    %79 = arith.extf %78 : vector<9x784xbf16> to vector<9x784xf32>
    %cst_25 = arith.constant dense<0.000000e+00> : vector<8x784xf32>
    %80 = tpu.matmul %0, %79, %cst_25 {dimension_numbers = #tpu.dot_dimension_numbers<[1], [0], [0], [1], [0, 0, 1, 1], [], []>} : vector<8x9xf32>, vector<9x784xf32>, vector<8x784xf32> -> vector<8x784xf32>
    %81 = vector.extract_strided_slice %80 {offsets = [0, 0], sizes = [8, 196], strides = [1, 1]} : vector<8x784xf32> to vector<8x196xf32>
    %82 = vector.extract_strided_slice %80 {offsets = [0, 196], sizes = [8, 196], strides = [1, 1]} : vector<8x784xf32> to vector<8x196xf32>
    %83 = arith.maximumf %81, %82 : vector<8x196xf32>
    %84 = vector.extract_strided_slice %80 {offsets = [0, 392], sizes = [8, 196], strides = [1, 1]} : vector<8x784xf32> to vector<8x196xf32>
    %85 = vector.extract_strided_slice %80 {offsets = [0, 588], sizes = [8, 196], strides = [1, 1]} : vector<8x784xf32> to vector<8x196xf32>
    %86 = arith.maximumf %84, %85 : vector<8x196xf32>
    %87 = arith.maximumf %83, %86 : vector<8x196xf32>
    %88 = vector.broadcast %1 : vector<8x1xf32> to vector<8x196xf32>
    %89 = arith.addf %87, %88 : vector<8x196xf32>
    %cst_26 = arith.constant 0.000000e+00 : f32
    %90 = vector.broadcast %cst_26 : f32 to vector<8x196xf32>
    %91 = arith.maximumf %89, %90 : vector<8x196xf32>
    %c6 = arith.constant 6 : index
    %c0_27 = arith.constant 0 : index
    %c0_28 = arith.constant 0 : index
    %92 = vector.load %arg1[%c6, %c0_27, %c0_28] : memref<8x9x784xbf16, #tpu.memory_space<vmem>>, vector<1x9x784xbf16>
    %93 = vector.shape_cast %92 : vector<1x9x784xbf16> to vector<9x784xbf16>
    %94 = arith.extf %93 : vector<9x784xbf16> to vector<9x784xf32>
    %cst_29 = arith.constant dense<0.000000e+00> : vector<8x784xf32>
    %95 = tpu.matmul %0, %94, %cst_29 {dimension_numbers = #tpu.dot_dimension_numbers<[1], [0], [0], [1], [0, 0, 1, 1], [], []>} : vector<8x9xf32>, vector<9x784xf32>, vector<8x784xf32> -> vector<8x784xf32>
    %96 = vector.extract_strided_slice %95 {offsets = [0, 0], sizes = [8, 196], strides = [1, 1]} : vector<8x784xf32> to vector<8x196xf32>
    %97 = vector.extract_strided_slice %95 {offsets = [0, 196], sizes = [8, 196], strides = [1, 1]} : vector<8x784xf32> to vector<8x196xf32>
    %98 = arith.maximumf %96, %97 : vector<8x196xf32>
    %99 = vector.extract_strided_slice %95 {offsets = [0, 392], sizes = [8, 196], strides = [1, 1]} : vector<8x784xf32> to vector<8x196xf32>
    %100 = vector.extract_strided_slice %95 {offsets = [0, 588], sizes = [8, 196], strides = [1, 1]} : vector<8x784xf32> to vector<8x196xf32>
    %101 = arith.maximumf %99, %100 : vector<8x196xf32>
    %102 = arith.maximumf %98, %101 : vector<8x196xf32>
    %103 = vector.broadcast %1 : vector<8x1xf32> to vector<8x196xf32>
    %104 = arith.addf %102, %103 : vector<8x196xf32>
    %cst_30 = arith.constant 0.000000e+00 : f32
    %105 = vector.broadcast %cst_30 : f32 to vector<8x196xf32>
    %106 = arith.maximumf %104, %105 : vector<8x196xf32>
    %c7 = arith.constant 7 : index
    %c0_31 = arith.constant 0 : index
    %c0_32 = arith.constant 0 : index
    %107 = vector.load %arg1[%c7, %c0_31, %c0_32] : memref<8x9x784xbf16, #tpu.memory_space<vmem>>, vector<1x9x784xbf16>
    %108 = vector.shape_cast %107 : vector<1x9x784xbf16> to vector<9x784xbf16>
    %109 = arith.extf %108 : vector<9x784xbf16> to vector<9x784xf32>
    %cst_33 = arith.constant dense<0.000000e+00> : vector<8x784xf32>
    %110 = tpu.matmul %0, %109, %cst_33 {dimension_numbers = #tpu.dot_dimension_numbers<[1], [0], [0], [1], [0, 0, 1, 1], [], []>} : vector<8x9xf32>, vector<9x784xf32>, vector<8x784xf32> -> vector<8x784xf32>
    %111 = vector.extract_strided_slice %110 {offsets = [0, 0], sizes = [8, 196], strides = [1, 1]} : vector<8x784xf32> to vector<8x196xf32>
    %112 = vector.extract_strided_slice %110 {offsets = [0, 196], sizes = [8, 196], strides = [1, 1]} : vector<8x784xf32> to vector<8x196xf32>
    %113 = arith.maximumf %111, %112 : vector<8x196xf32>
    %114 = vector.extract_strided_slice %110 {offsets = [0, 392], sizes = [8, 196], strides = [1, 1]} : vector<8x784xf32> to vector<8x196xf32>
    %115 = vector.extract_strided_slice %110 {offsets = [0, 588], sizes = [8, 196], strides = [1, 1]} : vector<8x784xf32> to vector<8x196xf32>
    %116 = arith.maximumf %114, %115 : vector<8x196xf32>
    %117 = arith.maximumf %113, %116 : vector<8x196xf32>
    %118 = vector.broadcast %1 : vector<8x1xf32> to vector<8x196xf32>
    %119 = arith.addf %117, %118 : vector<8x196xf32>
    %cst_34 = arith.constant 0.000000e+00 : f32
    %120 = vector.broadcast %cst_34 : f32 to vector<8x196xf32>
    %121 = arith.maximumf %119, %120 : vector<8x196xf32>
    %cst_35 = arith.constant 0.000000e+00 : f32
    %122 = vector.broadcast %cst_35 : f32 to vector<8x10xf32>
    %123 = vector.extract_strided_slice %16 {offsets = [0, 0], sizes = [1, 196], strides = [1, 1]} : vector<8x196xf32> to vector<1x196xf32>
    %124 = vector.extract_strided_slice %31 {offsets = [0, 0], sizes = [1, 196], strides = [1, 1]} : vector<8x196xf32> to vector<1x196xf32>
    %125 = vector.extract_strided_slice %46 {offsets = [0, 0], sizes = [1, 196], strides = [1, 1]} : vector<8x196xf32> to vector<1x196xf32>
    %126 = vector.extract_strided_slice %61 {offsets = [0, 0], sizes = [1, 196], strides = [1, 1]} : vector<8x196xf32> to vector<1x196xf32>
    %127 = vector.extract_strided_slice %76 {offsets = [0, 0], sizes = [1, 196], strides = [1, 1]} : vector<8x196xf32> to vector<1x196xf32>
    %128 = vector.extract_strided_slice %91 {offsets = [0, 0], sizes = [1, 196], strides = [1, 1]} : vector<8x196xf32> to vector<1x196xf32>
    %129 = vector.extract_strided_slice %106 {offsets = [0, 0], sizes = [1, 196], strides = [1, 1]} : vector<8x196xf32> to vector<1x196xf32>
    %130 = vector.extract_strided_slice %121 {offsets = [0, 0], sizes = [1, 196], strides = [1, 1]} : vector<8x196xf32> to vector<1x196xf32>
    %131 = tpu.concatenate %123, %124, %125, %126, %127, %128, %129, %130 in 0 : vector<1x196xf32>, vector<1x196xf32>, vector<1x196xf32>, vector<1x196xf32>, vector<1x196xf32>, vector<1x196xf32>, vector<1x196xf32>, vector<1x196xf32> -> vector<8x196xf32>
    %c0_36 = arith.constant 0 : index
    %c0_37 = arith.constant 0 : index
    %c0_38 = arith.constant 0 : index
    %132 = vector.load %arg4[%c0_36, %c0_37, %c0_38] : memref<8x196x10xf32, #tpu.memory_space<vmem>>, vector<1x196x10xf32>
    %133 = vector.shape_cast %132 : vector<1x196x10xf32> to vector<196x10xf32>
    %cst_39 = arith.constant dense<0.000000e+00> : vector<8x10xf32>
    %134 = tpu.matmul %131, %133, %cst_39 {dimension_numbers = #tpu.dot_dimension_numbers<[1], [0], [0], [1], [0, 0, 1, 1], [], []>} : vector<8x196xf32>, vector<196x10xf32>, vector<8x10xf32> -> vector<8x10xf32>
    %135 = arith.addf %122, %134 : vector<8x10xf32>
    %136 = vector.extract_strided_slice %16 {offsets = [1, 0], sizes = [1, 196], strides = [1, 1]} : vector<8x196xf32> to vector<1x196xf32>
    %137 = vector.extract_strided_slice %31 {offsets = [1, 0], sizes = [1, 196], strides = [1, 1]} : vector<8x196xf32> to vector<1x196xf32>
    %138 = vector.extract_strided_slice %46 {offsets = [1, 0], sizes = [1, 196], strides = [1, 1]} : vector<8x196xf32> to vector<1x196xf32>
    %139 = vector.extract_strided_slice %61 {offsets = [1, 0], sizes = [1, 196], strides = [1, 1]} : vector<8x196xf32> to vector<1x196xf32>
    %140 = vector.extract_strided_slice %76 {offsets = [1, 0], sizes = [1, 196], strides = [1, 1]} : vector<8x196xf32> to vector<1x196xf32>
    %141 = vector.extract_strided_slice %91 {offsets = [1, 0], sizes = [1, 196], strides = [1, 1]} : vector<8x196xf32> to vector<1x196xf32>
    %142 = vector.extract_strided_slice %106 {offsets = [1, 0], sizes = [1, 196], strides = [1, 1]} : vector<8x196xf32> to vector<1x196xf32>
    %143 = vector.extract_strided_slice %121 {offsets = [1, 0], sizes = [1, 196], strides = [1, 1]} : vector<8x196xf32> to vector<1x196xf32>
    %144 = tpu.concatenate %136, %137, %138, %139, %140, %141, %142, %143 in 0 : vector<1x196xf32>, vector<1x196xf32>, vector<1x196xf32>, vector<1x196xf32>, vector<1x196xf32>, vector<1x196xf32>, vector<1x196xf32>, vector<1x196xf32> -> vector<8x196xf32>
    %c1_40 = arith.constant 1 : index
    %c0_41 = arith.constant 0 : index
    %c0_42 = arith.constant 0 : index
    %145 = vector.load %arg4[%c1_40, %c0_41, %c0_42] : memref<8x196x10xf32, #tpu.memory_space<vmem>>, vector<1x196x10xf32>
    %146 = vector.shape_cast %145 : vector<1x196x10xf32> to vector<196x10xf32>
    %cst_43 = arith.constant dense<0.000000e+00> : vector<8x10xf32>
    %147 = tpu.matmul %144, %146, %cst_43 {dimension_numbers = #tpu.dot_dimension_numbers<[1], [0], [0], [1], [0, 0, 1, 1], [], []>} : vector<8x196xf32>, vector<196x10xf32>, vector<8x10xf32> -> vector<8x10xf32>
    %148 = arith.addf %135, %147 : vector<8x10xf32>
    %149 = vector.extract_strided_slice %16 {offsets = [2, 0], sizes = [1, 196], strides = [1, 1]} : vector<8x196xf32> to vector<1x196xf32>
    %150 = vector.extract_strided_slice %31 {offsets = [2, 0], sizes = [1, 196], strides = [1, 1]} : vector<8x196xf32> to vector<1x196xf32>
    %151 = vector.extract_strided_slice %46 {offsets = [2, 0], sizes = [1, 196], strides = [1, 1]} : vector<8x196xf32> to vector<1x196xf32>
    %152 = vector.extract_strided_slice %61 {offsets = [2, 0], sizes = [1, 196], strides = [1, 1]} : vector<8x196xf32> to vector<1x196xf32>
    %153 = vector.extract_strided_slice %76 {offsets = [2, 0], sizes = [1, 196], strides = [1, 1]} : vector<8x196xf32> to vector<1x196xf32>
    %154 = vector.extract_strided_slice %91 {offsets = [2, 0], sizes = [1, 196], strides = [1, 1]} : vector<8x196xf32> to vector<1x196xf32>
    %155 = vector.extract_strided_slice %106 {offsets = [2, 0], sizes = [1, 196], strides = [1, 1]} : vector<8x196xf32> to vector<1x196xf32>
    %156 = vector.extract_strided_slice %121 {offsets = [2, 0], sizes = [1, 196], strides = [1, 1]} : vector<8x196xf32> to vector<1x196xf32>
    %157 = tpu.concatenate %149, %150, %151, %152, %153, %154, %155, %156 in 0 : vector<1x196xf32>, vector<1x196xf32>, vector<1x196xf32>, vector<1x196xf32>, vector<1x196xf32>, vector<1x196xf32>, vector<1x196xf32>, vector<1x196xf32> -> vector<8x196xf32>
    %c2_44 = arith.constant 2 : index
    %c0_45 = arith.constant 0 : index
    %c0_46 = arith.constant 0 : index
    %158 = vector.load %arg4[%c2_44, %c0_45, %c0_46] : memref<8x196x10xf32, #tpu.memory_space<vmem>>, vector<1x196x10xf32>
    %159 = vector.shape_cast %158 : vector<1x196x10xf32> to vector<196x10xf32>
    %cst_47 = arith.constant dense<0.000000e+00> : vector<8x10xf32>
    %160 = tpu.matmul %157, %159, %cst_47 {dimension_numbers = #tpu.dot_dimension_numbers<[1], [0], [0], [1], [0, 0, 1, 1], [], []>} : vector<8x196xf32>, vector<196x10xf32>, vector<8x10xf32> -> vector<8x10xf32>
    %161 = arith.addf %148, %160 : vector<8x10xf32>
    %162 = vector.extract_strided_slice %16 {offsets = [3, 0], sizes = [1, 196], strides = [1, 1]} : vector<8x196xf32> to vector<1x196xf32>
    %163 = vector.extract_strided_slice %31 {offsets = [3, 0], sizes = [1, 196], strides = [1, 1]} : vector<8x196xf32> to vector<1x196xf32>
    %164 = vector.extract_strided_slice %46 {offsets = [3, 0], sizes = [1, 196], strides = [1, 1]} : vector<8x196xf32> to vector<1x196xf32>
    %165 = vector.extract_strided_slice %61 {offsets = [3, 0], sizes = [1, 196], strides = [1, 1]} : vector<8x196xf32> to vector<1x196xf32>
    %166 = vector.extract_strided_slice %76 {offsets = [3, 0], sizes = [1, 196], strides = [1, 1]} : vector<8x196xf32> to vector<1x196xf32>
    %167 = vector.extract_strided_slice %91 {offsets = [3, 0], sizes = [1, 196], strides = [1, 1]} : vector<8x196xf32> to vector<1x196xf32>
    %168 = vector.extract_strided_slice %106 {offsets = [3, 0], sizes = [1, 196], strides = [1, 1]} : vector<8x196xf32> to vector<1x196xf32>
    %169 = vector.extract_strided_slice %121 {offsets = [3, 0], sizes = [1, 196], strides = [1, 1]} : vector<8x196xf32> to vector<1x196xf32>
    %170 = tpu.concatenate %162, %163, %164, %165, %166, %167, %168, %169 in 0 : vector<1x196xf32>, vector<1x196xf32>, vector<1x196xf32>, vector<1x196xf32>, vector<1x196xf32>, vector<1x196xf32>, vector<1x196xf32>, vector<1x196xf32> -> vector<8x196xf32>
    %c3_48 = arith.constant 3 : index
    %c0_49 = arith.constant 0 : index
    %c0_50 = arith.constant 0 : index
    %171 = vector.load %arg4[%c3_48, %c0_49, %c0_50] : memref<8x196x10xf32, #tpu.memory_space<vmem>>, vector<1x196x10xf32>
    %172 = vector.shape_cast %171 : vector<1x196x10xf32> to vector<196x10xf32>
    %cst_51 = arith.constant dense<0.000000e+00> : vector<8x10xf32>
    %173 = tpu.matmul %170, %172, %cst_51 {dimension_numbers = #tpu.dot_dimension_numbers<[1], [0], [0], [1], [0, 0, 1, 1], [], []>} : vector<8x196xf32>, vector<196x10xf32>, vector<8x10xf32> -> vector<8x10xf32>
    %174 = arith.addf %161, %173 : vector<8x10xf32>
    %175 = vector.extract_strided_slice %16 {offsets = [4, 0], sizes = [1, 196], strides = [1, 1]} : vector<8x196xf32> to vector<1x196xf32>
    %176 = vector.extract_strided_slice %31 {offsets = [4, 0], sizes = [1, 196], strides = [1, 1]} : vector<8x196xf32> to vector<1x196xf32>
    %177 = vector.extract_strided_slice %46 {offsets = [4, 0], sizes = [1, 196], strides = [1, 1]} : vector<8x196xf32> to vector<1x196xf32>
    %178 = vector.extract_strided_slice %61 {offsets = [4, 0], sizes = [1, 196], strides = [1, 1]} : vector<8x196xf32> to vector<1x196xf32>
    %179 = vector.extract_strided_slice %76 {offsets = [4, 0], sizes = [1, 196], strides = [1, 1]} : vector<8x196xf32> to vector<1x196xf32>
    %180 = vector.extract_strided_slice %91 {offsets = [4, 0], sizes = [1, 196], strides = [1, 1]} : vector<8x196xf32> to vector<1x196xf32>
    %181 = vector.extract_strided_slice %106 {offsets = [4, 0], sizes = [1, 196], strides = [1, 1]} : vector<8x196xf32> to vector<1x196xf32>
    %182 = vector.extract_strided_slice %121 {offsets = [4, 0], sizes = [1, 196], strides = [1, 1]} : vector<8x196xf32> to vector<1x196xf32>
    %183 = tpu.concatenate %175, %176, %177, %178, %179, %180, %181, %182 in 0 : vector<1x196xf32>, vector<1x196xf32>, vector<1x196xf32>, vector<1x196xf32>, vector<1x196xf32>, vector<1x196xf32>, vector<1x196xf32>, vector<1x196xf32> -> vector<8x196xf32>
    %c4_52 = arith.constant 4 : index
    %c0_53 = arith.constant 0 : index
    %c0_54 = arith.constant 0 : index
    %184 = vector.load %arg4[%c4_52, %c0_53, %c0_54] : memref<8x196x10xf32, #tpu.memory_space<vmem>>, vector<1x196x10xf32>
    %185 = vector.shape_cast %184 : vector<1x196x10xf32> to vector<196x10xf32>
    %cst_55 = arith.constant dense<0.000000e+00> : vector<8x10xf32>
    %186 = tpu.matmul %183, %185, %cst_55 {dimension_numbers = #tpu.dot_dimension_numbers<[1], [0], [0], [1], [0, 0, 1, 1], [], []>} : vector<8x196xf32>, vector<196x10xf32>, vector<8x10xf32> -> vector<8x10xf32>
    %187 = arith.addf %174, %186 : vector<8x10xf32>
    %188 = vector.extract_strided_slice %16 {offsets = [5, 0], sizes = [1, 196], strides = [1, 1]} : vector<8x196xf32> to vector<1x196xf32>
    %189 = vector.extract_strided_slice %31 {offsets = [5, 0], sizes = [1, 196], strides = [1, 1]} : vector<8x196xf32> to vector<1x196xf32>
    %190 = vector.extract_strided_slice %46 {offsets = [5, 0], sizes = [1, 196], strides = [1, 1]} : vector<8x196xf32> to vector<1x196xf32>
    %191 = vector.extract_strided_slice %61 {offsets = [5, 0], sizes = [1, 196], strides = [1, 1]} : vector<8x196xf32> to vector<1x196xf32>
    %192 = vector.extract_strided_slice %76 {offsets = [5, 0], sizes = [1, 196], strides = [1, 1]} : vector<8x196xf32> to vector<1x196xf32>
    %193 = vector.extract_strided_slice %91 {offsets = [5, 0], sizes = [1, 196], strides = [1, 1]} : vector<8x196xf32> to vector<1x196xf32>
    %194 = vector.extract_strided_slice %106 {offsets = [5, 0], sizes = [1, 196], strides = [1, 1]} : vector<8x196xf32> to vector<1x196xf32>
    %195 = vector.extract_strided_slice %121 {offsets = [5, 0], sizes = [1, 196], strides = [1, 1]} : vector<8x196xf32> to vector<1x196xf32>
    %196 = tpu.concatenate %188, %189, %190, %191, %192, %193, %194, %195 in 0 : vector<1x196xf32>, vector<1x196xf32>, vector<1x196xf32>, vector<1x196xf32>, vector<1x196xf32>, vector<1x196xf32>, vector<1x196xf32>, vector<1x196xf32> -> vector<8x196xf32>
    %c5_56 = arith.constant 5 : index
    %c0_57 = arith.constant 0 : index
    %c0_58 = arith.constant 0 : index
    %197 = vector.load %arg4[%c5_56, %c0_57, %c0_58] : memref<8x196x10xf32, #tpu.memory_space<vmem>>, vector<1x196x10xf32>
    %198 = vector.shape_cast %197 : vector<1x196x10xf32> to vector<196x10xf32>
    %cst_59 = arith.constant dense<0.000000e+00> : vector<8x10xf32>
    %199 = tpu.matmul %196, %198, %cst_59 {dimension_numbers = #tpu.dot_dimension_numbers<[1], [0], [0], [1], [0, 0, 1, 1], [], []>} : vector<8x196xf32>, vector<196x10xf32>, vector<8x10xf32> -> vector<8x10xf32>
    %200 = arith.addf %187, %199 : vector<8x10xf32>
    %201 = vector.extract_strided_slice %16 {offsets = [6, 0], sizes = [1, 196], strides = [1, 1]} : vector<8x196xf32> to vector<1x196xf32>
    %202 = vector.extract_strided_slice %31 {offsets = [6, 0], sizes = [1, 196], strides = [1, 1]} : vector<8x196xf32> to vector<1x196xf32>
    %203 = vector.extract_strided_slice %46 {offsets = [6, 0], sizes = [1, 196], strides = [1, 1]} : vector<8x196xf32> to vector<1x196xf32>
    %204 = vector.extract_strided_slice %61 {offsets = [6, 0], sizes = [1, 196], strides = [1, 1]} : vector<8x196xf32> to vector<1x196xf32>
    %205 = vector.extract_strided_slice %76 {offsets = [6, 0], sizes = [1, 196], strides = [1, 1]} : vector<8x196xf32> to vector<1x196xf32>
    %206 = vector.extract_strided_slice %91 {offsets = [6, 0], sizes = [1, 196], strides = [1, 1]} : vector<8x196xf32> to vector<1x196xf32>
    %207 = vector.extract_strided_slice %106 {offsets = [6, 0], sizes = [1, 196], strides = [1, 1]} : vector<8x196xf32> to vector<1x196xf32>
    %208 = vector.extract_strided_slice %121 {offsets = [6, 0], sizes = [1, 196], strides = [1, 1]} : vector<8x196xf32> to vector<1x196xf32>
    %209 = tpu.concatenate %201, %202, %203, %204, %205, %206, %207, %208 in 0 : vector<1x196xf32>, vector<1x196xf32>, vector<1x196xf32>, vector<1x196xf32>, vector<1x196xf32>, vector<1x196xf32>, vector<1x196xf32>, vector<1x196xf32> -> vector<8x196xf32>
    %c6_60 = arith.constant 6 : index
    %c0_61 = arith.constant 0 : index
    %c0_62 = arith.constant 0 : index
    %210 = vector.load %arg4[%c6_60, %c0_61, %c0_62] : memref<8x196x10xf32, #tpu.memory_space<vmem>>, vector<1x196x10xf32>
    %211 = vector.shape_cast %210 : vector<1x196x10xf32> to vector<196x10xf32>
    %cst_63 = arith.constant dense<0.000000e+00> : vector<8x10xf32>
    %212 = tpu.matmul %209, %211, %cst_63 {dimension_numbers = #tpu.dot_dimension_numbers<[1], [0], [0], [1], [0, 0, 1, 1], [], []>} : vector<8x196xf32>, vector<196x10xf32>, vector<8x10xf32> -> vector<8x10xf32>
    %213 = arith.addf %200, %212 : vector<8x10xf32>
    %214 = vector.extract_strided_slice %16 {offsets = [7, 0], sizes = [1, 196], strides = [1, 1]} : vector<8x196xf32> to vector<1x196xf32>
    %215 = vector.extract_strided_slice %31 {offsets = [7, 0], sizes = [1, 196], strides = [1, 1]} : vector<8x196xf32> to vector<1x196xf32>
    %216 = vector.extract_strided_slice %46 {offsets = [7, 0], sizes = [1, 196], strides = [1, 1]} : vector<8x196xf32> to vector<1x196xf32>
    %217 = vector.extract_strided_slice %61 {offsets = [7, 0], sizes = [1, 196], strides = [1, 1]} : vector<8x196xf32> to vector<1x196xf32>
    %218 = vector.extract_strided_slice %76 {offsets = [7, 0], sizes = [1, 196], strides = [1, 1]} : vector<8x196xf32> to vector<1x196xf32>
    %219 = vector.extract_strided_slice %91 {offsets = [7, 0], sizes = [1, 196], strides = [1, 1]} : vector<8x196xf32> to vector<1x196xf32>
    %220 = vector.extract_strided_slice %106 {offsets = [7, 0], sizes = [1, 196], strides = [1, 1]} : vector<8x196xf32> to vector<1x196xf32>
    %221 = vector.extract_strided_slice %121 {offsets = [7, 0], sizes = [1, 196], strides = [1, 1]} : vector<8x196xf32> to vector<1x196xf32>
    %222 = tpu.concatenate %214, %215, %216, %217, %218, %219, %220, %221 in 0 : vector<1x196xf32>, vector<1x196xf32>, vector<1x196xf32>, vector<1x196xf32>, vector<1x196xf32>, vector<1x196xf32>, vector<1x196xf32>, vector<1x196xf32> -> vector<8x196xf32>
    %c7_64 = arith.constant 7 : index
    %c0_65 = arith.constant 0 : index
    %c0_66 = arith.constant 0 : index
    %223 = vector.load %arg4[%c7_64, %c0_65, %c0_66] : memref<8x196x10xf32, #tpu.memory_space<vmem>>, vector<1x196x10xf32>
    %224 = vector.shape_cast %223 : vector<1x196x10xf32> to vector<196x10xf32>
    %cst_67 = arith.constant dense<0.000000e+00> : vector<8x10xf32>
    %225 = tpu.matmul %222, %224, %cst_67 {dimension_numbers = #tpu.dot_dimension_numbers<[1], [0], [0], [1], [0, 0, 1, 1], [], []>} : vector<8x196xf32>, vector<196x10xf32>, vector<8x10xf32> -> vector<8x10xf32>
    %226 = arith.addf %213, %225 : vector<8x10xf32>
    %c0_68 = arith.constant 0 : index
    %c0_69 = arith.constant 0 : index
    %227 = vector.load %arg5[%c0_68, %c0_69] : memref<1x10xf32, #tpu.memory_space<vmem>>, vector<1x10xf32>
    %228 = vector.broadcast %227 : vector<1x10xf32> to vector<8x10xf32>
    %229 = arith.addf %226, %228 : vector<8x10xf32>
    %c0_70 = arith.constant 0 : index
    %c0_71 = arith.constant 0 : index
    %230 = vector.load %arg6[%c0_70, %c0_71] : memref<8x10xf32, #tpu.memory_space<vmem>>, vector<8x10xf32>
    tpu.vector_store %arg6[%c0_70, %c0_71], %229 {strides = array<i32>} : memref<8x10xf32, #tpu.memory_space<vmem>>, vector<8x10xf32>,
    return
  }
  func.func @transform_0(%arg0: i32) -> (i32, i32, i32) {
    %c0_i32 = arith.constant 0 : i32
    %c0_i32_0 = arith.constant 0 : i32
    %c0_i32_1 = arith.constant 0 : i32
    return %arg0, %c0_i32, %c0_i32_0 : i32, i32, i32
  }
  func.func @transform_1(%arg0: i32) -> (i32, i32) {
    %c0_i32 = arith.constant 0 : i32
    %c0_i32_0 = arith.constant 0 : i32
    %c0_i32_1 = arith.constant 0 : i32
    return %c0_i32, %c0_i32_0 : i32, i32
  }
  func.func @transform_2(%arg0: i32) -> (i32, i32) {
    %c0_i32 = arith.constant 0 : i32
    %c0_i32_0 = arith.constant 0 : i32
    %c0_i32_1 = arith.constant 0 : i32
    return %c0_i32, %c0_i32_0 : i32, i32
  }
  func.func @transform_3(%arg0: i32) -> (i32, i32, i32) {
    %c0_i32 = arith.constant 0 : i32
    %c0_i32_0 = arith.constant 0 : i32
    %c0_i32_1 = arith.constant 0 : i32
    %c0_i32_2 = arith.constant 0 : i32
    return %c0_i32, %c0_i32_0, %c0_i32_1 : i32, i32, i32
  }
  func.func @transform_4(%arg0: i32) -> (i32, i32) {
    %c0_i32 = arith.constant 0 : i32
    %c0_i32_0 = arith.constant 0 : i32
    %c0_i32_1 = arith.constant 0 : i32
    return %c0_i32, %c0_i32_0 : i32, i32
  }
  func.func @transform_5(%arg0: i32) -> (i32, i32) {
    %c0_i32 = arith.constant 0 : i32
    %c0_i32_0 = arith.constant 0 : i32
    return %arg0, %c0_i32 : i32, i32
  }
}

</mosaic_0001>

<llo_original>
// kernel: convnet_forward.1
$region0: #{convnet_forward.1}
  #allocation0 [shape = 'u32[]', space=smem, size = 0x4, offset = 0x4, fixed_abs, tag = 'smem constant byte address 0x4 - core index']
  #allocation1 [shape = 'u32[72,128]{1,0:T(1,128)}', space=vmem, size = 0x9000, scoped, tag = 'internal scratch']
  %s0 = inlined_call_operand.vmem [shape: bf16[8,9,784], index: 0, kind: input, shape index: {}]
  %s1 = inlined_call_operand.vmem [shape: f32[8,9], index: 1, kind: input, shape index: {}]
  %s2 = inlined_call_operand.vmem [shape: f32[8,1], index: 2, kind: input, shape index: {}]
  %s3 = inlined_call_operand.vmem [shape: f32[8,196,10], index: 3, kind: input, shape index: {}]
  %s4 = inlined_call_operand.vmem [shape: f32[1,10], index: 4, kind: input, shape index: {}]
  %s5 = inlined_call_operand.vmem [shape: f32[8,10], index: 5, kind: output, shape index: {}]
  %s6 = sld [smem:[#allocation0]]
  $region30: #{convnet_forward.1} parent=0
    _
  %s8 = ssub.s32 1, %s6
  %s9 = scalar_select 0, %s8, %s6
  // Predicated region
  $region2: #{convnet_forward.1} parent=0 // pred_check
    _
  $region3: #{convnet_forward.1} parent=0 // pred_check_branch
    %11 = sbr.rel (0) target = $region5
  $region4: #{convnet_forward.1} parent=0 // pred_region
    _
  $region5: #{convnet_forward.1} parent=0 // pred_fallthru
    _
  // Predicated region
  $region6: #{convnet_forward.1} parent=0 // pred_check
    _
  $region7: #{convnet_forward.1} parent=0 // pred_check_branch
    %13 = sbr.rel (0) target = $region9
  $region8: #{convnet_forward.1} parent=0 // pred_region
    _
  $region9: #{convnet_forward.1} parent=0 // pred_fallthru
    _
  // Predicated region
  $region10: #{convnet_forward.1} parent=0 // pred_check
    _
  $region11: #{convnet_forward.1} parent=0 // pred_check_branch
    %15 = sbr.rel (0) target = $region13
  $region12: #{convnet_forward.1} parent=0 // pred_region
    _
  $region13: #{convnet_forward.1} parent=0 // pred_fallthru
    _
  // Predicated region
  $region14: #{convnet_forward.1} parent=0 // pred_check
    _
  $region15: #{convnet_forward.1} parent=0 // pred_check_branch
    %17 = sbr.rel (0) target = $region17
  $region16: #{convnet_forward.1} parent=0 // pred_region
    _
  $region17: #{convnet_forward.1} parent=0 // pred_fallthru
    _
  // Predicated region
  $region18: #{convnet_forward.1} parent=0 // pred_check
    _
  $region19: #{convnet_forward.1} parent=0 // pred_check_branch
    %19 = sbr.rel (0) target = $region21
  $region20: #{convnet_forward.1} parent=0 // pred_region
    _
  $region21: #{convnet_forward.1} parent=0 // pred_fallthru
    _
  %v20 = vld [vmem:[%s1] sm:$0xff]
  %v21 = vld [vmem:[%s2] sm:$0xff]
  %v22 = vld [vmem:[%s0] sm:$0xff]
  %v23 = vld [vmem:[%s0 + $0x8] sm:$0xff]
  %v24 = vld [vmem:[%s0 + $0x10] sm:$0xff]
  %v25 = vld [vmem:[%s0 + $0x18] sm:$0xf]
  %v26 = vld [vmem:[%s0 + $0x1c] sm:$0x11]
  %v27 = vld [vmem:[%s0 + $0x24] sm:$0x11]
  %v28 = vld [vmem:[%s0 + $0x2c] sm:$0x11]
  %v29 = vld [vmem:[%s0 + $0x34] sm:$0x1]
  %v30 = vunpack.c.l.bf16 %v22
  %v31 = vunpack.c.h.bf16 %v22
  %v32 = vunpack.c.l.bf16 %v23
  %v33 = vunpack.c.h.bf16 %v23
  %v34 = vunpack.c.l.bf16 %v24
  %v35 = vunpack.c.h.bf16 %v24
  %v36 = vunpack.c.l.bf16 %v25
  %v37 = vunpack.c.l.bf16 %v26
  %v38 = vunpack.c.h.bf16 %v26
  %v39 = vunpack.c.l.bf16 %v27
  %v40 = vunpack.c.h.bf16 %v27
  %v41 = vunpack.c.l.bf16 %v28
  %v42 = vunpack.c.h.bf16 %v28
  %v43 = vunpack.c.l.bf16 %v29
  %vm44 = vcmask 72704
  %v46 = vsel %vm44, %v20, 0
  %vm48 = vcmask 1040384
  %v50 = vsel %vm48, %v37, 0
  %v53 = vsel %vm48, %v38, 0
  %v56 = vsel %vm48, %v39, 0
  %v59 = vsel %vm48, %v40, 0
  %v62 = vsel %vm48, %v41, 0
  %v65 = vsel %vm48, %v42, 0
  %v68 = vsel %vm48, %v43, 0
  %70 = vmatpush.msra.mxu0 0.0
  %71 = vmatpush.msra.mxu0 0.0
  %72 = vmatpush.msra.mxu0 0.0
  %73 = vmatpush.msra.mxu0 0.0
  %74 = vmatpush.msra.mxu0 0.0
  %75 = vmatpush.msra.mxu0 0.0
  %76 = vmatpush.msra.mxu0 0.0
  %77 = vmatpush.msra.mxu0 0.0
  %78 = vmatpush.msra.mxu0 0.0
  %79 = vmatpush.msra.mxu0 0.0
  %80 = vmatpush.msra.mxu0 0.0
  %81 = vmatpush.msra.mxu0 0.0
  %82 = vmatpush.msra.mxu0 0.0
  %83 = vmatpush.msra.mxu0 0.0
  %84 = vmatpush.msra.mxu0 %v50
  %85 = vmatpush.msra.mxu0 %v30
  %86 = vmatmul.f32.gmra.mxu0 %v46
  %v87 = vpop.f32.mrf.mxu0
  %v88 = vadd.f32 0.0, %v87
  %89 = vdwg.mxu0
  %90 = vmatpush.msra.mxu0 0.0
  %91 = vmatpush.msra.mxu0 0.0
  %92 = vmatpush.msra.mxu0 0.0
  %93 = vmatpush.msra.mxu0 0.0
  %94 = vmatpush.msra.mxu0 0.0
  %95 = vmatpush.msra.mxu0 0.0
  %96 = vmatpush.msra.mxu0 0.0
  %97 = vmatpush.msra.mxu0 0.0
  %98 = vmatpush.msra.mxu0 0.0
  %99 = vmatpush.msra.mxu0 0.0
  %100 = vmatpush.msra.mxu0 0.0
  %101 = vmatpush.msra.mxu0 0.0
  %102 = vmatpush.msra.mxu0 0.0
  %103 = vmatpush.msra.mxu0 0.0
  %104 = vmatpush.msra.mxu0 %v53
  %105 = vmatpush.msra.mxu0 %v31
  %106 = vmatmul.f32.gmra.mxu0 %v46
  %v107 = vpop.f32.mrf.mxu0
  %v108 = vadd.f32 0.0, %v107
  %109 = vdwg.mxu0
  %110 = vmatpush.msra.mxu0 0.0
  %111 = vmatpush.msra.mxu0 0.0
  %112 = vmatpush.msra.mxu0 0.0
  %113 = vmatpush.msra.mxu0 0.0
  %114 = vmatpush.msra.mxu0 0.0
  %115 = vmatpush.msra.mxu0 0.0
  %116 = vmatpush.msra.mxu0 0.0
  %117 = vmatpush.msra.mxu0 0.0
  %118 = vmatpush.msra.mxu0 0.0
  %119 = vmatpush.msra.mxu0 0.0
  %120 = vmatpush.msra.mxu0 0.0
  %121 = vmatpush.msra.mxu0 0.0
  %122 = vmatpush.msra.mxu0 0.0
  %123 = vmatpush.msra.mxu0 0.0
  %124 = vmatpush.msra.mxu0 %v56
  %125 = vmatpush.msra.mxu0 %v32
  %126 = vmatmul.f32.gmra.mxu0 %v46
  %v127 = vpop.f32.mrf.mxu0
  %v128 = vadd.f32 0.0, %v127
  %129 = vdwg.mxu0
  %130 = vmatpush.msra.mxu0 0.0
  %131 = vmatpush.msra.mxu0 0.0
  %132 = vmatpush.msra.mxu0 0.0
  %133 = vmatpush.msra.mxu0 0.0
  %134 = vmatpush.msra.mxu0 0.0
  %135 = vmatpush.msra.mxu0 0.0
  %136 = vmatpush.msra.mxu0 0.0
  %137 = vmatpush.msra.mxu0 0.0
  %138 = vmatpush.msra.mxu0 0.0
  %139 = vmatpush.msra.mxu0 0.0
  %140 = vmatpush.msra.mxu0 0.0
  %141 = vmatpush.msra.mxu0 0.0
  %142 = vmatpush.msra.mxu0 0.0
  %143 = vmatpush.msra.mxu0 0.0
  %144 = vmatpush.msra.mxu0 %v59
  %145 = vmatpush.msra.mxu0 %v33
  %146 = vmatmul.f32.gmra.mxu0 %v46
  %v147 = vpop.f32.mrf.mxu0
  %v148 = vadd.f32 0.0, %v147
  %149 = vdwg.mxu0
  %150 = vmatpush.msra.mxu0 0.0
  %151 = vmatpush.msra.mxu0 0.0
  %152 = vmatpush.msra.mxu0 0.0
  %153 = vmatpush.msra.mxu0 0.0
  %154 = vmatpush.msra.mxu0 0.0
  %155 = vmatpush.msra.mxu0 0.0
  %156 = vmatpush.msra.mxu0 0.0
  %157 = vmatpush.msra.mxu0 0.0
  %158 = vmatpush.msra.mxu0 0.0
  %159 = vmatpush.msra.mxu0 0.0
  %160 = vmatpush.msra.mxu0 0.0
  %161 = vmatpush.msra.mxu0 0.0
  %162 = vmatpush.msra.mxu0 0.0
  %163 = vmatpush.msra.mxu0 0.0
  %164 = vmatpush.msra.mxu0 %v62
  %165 = vmatpush.msra.mxu0 %v34
  %166 = vmatmul.f32.gmra.mxu0 %v46
  %v167 = vpop.f32.mrf.mxu0
  %v168 = vadd.f32 0.0, %v167
  %169 = vdwg.mxu0
  %170 = vmatpush.msra.mxu0 0.0
  %171 = vmatpush.msra.mxu0 0.0
  %172 = vmatpush.msra.mxu0 0.0
  %173 = vmatpush.msra.mxu0 0.0
  %174 = vmatpush.msra.mxu0 0.0
  %175 = vmatpush.msra.mxu0 0.0
  %176 = vmatpush.msra.mxu0 0.0
  %177 = vmatpush.msra.mxu0 0.0
  %178 = vmatpush.msra.mxu0 0.0
  %179 = vmatpush.msra.mxu0 0.0
  %180 = vmatpush.msra.mxu0 0.0
  %181 = vmatpush.msra.mxu0 0.0
  %182 = vmatpush.msra.mxu0 0.0
  %183 = vmatpush.msra.mxu0 0.0
  %184 = vmatpush.msra.mxu0 %v65
  %185 = vmatpush.msra.mxu0 %v35
  %186 = vmatmul.f32.gmra.mxu0 %v46
  %v187 = vpop.f32.mrf.mxu0
  %v188 = vadd.f32 0.0, %v187
  %189 = vdwg.mxu0
  %190 = vmatpush.msra.mxu0 0.0
  %191 = vmatpush.msra.mxu0 0.0
  %192 = vmatpush.msra.mxu0 0.0
  %193 = vmatpush.msra.mxu0 0.0
  %194 = vmatpush.msra.mxu0 0.0
  %195 = vmatpush.msra.mxu0 0.0
  %196 = vmatpush.msra.mxu0 0.0
  %197 = vmatpush.msra.mxu0 0.0
  %198 = vmatpush.msra.mxu0 0.0
  %199 = vmatpush.msra.mxu0 0.0
  %200 = vmatpush.msra.mxu0 0.0
  %201 = vmatpush.msra.mxu0 0.0
  %202 = vmatpush.msra.mxu0 0.0
  %203 = vmatpush.msra.mxu0 0.0
  %204 = vmatpush.msra.mxu0 %v68
  %205 = vmatpush.msra.mxu0 %v36
  %206 = vmatmul.f32.gmra.mxu0 %v46
  %v207 = vpop.f32.mrf.mxu0
  %v208 = vadd.f32 0.0, %v207
  %209 = vdwg.mxu0
  %213 = vrot.lane.b32.xlu0 %v108, 60
  %v214 = vpop.permute.xlu0 %213
  %215 = vrot.lane.b32.xlu0 %v128, 60
  %v216 = vpop.permute.xlu0 %215
  %217 = vrot.lane.b32.xlu0 %v148, 60
  %v218 = vpop.permute.xlu0 %217
  %vm219 = vcmask 490496
  %v220 = vsel %vm219, %v214, %v216
  %v221 = vsel %vm219, %v216, %v218
  %v224 = vmax.f32 %v88, %v220
  %v225 = vmax.f32 %v108, %v221
  %229 = vrot.lane.b32.xlu0 %v168, 60
  %v230 = vpop.permute.xlu0 %229
  %231 = vrot.lane.b32.xlu0 %v188, 60
  %v232 = vpop.permute.xlu0 %231
  %233 = vrot.lane.b32.xlu0 %v208, 60
  %v234 = vpop.permute.xlu0 %233
  %v235 = vsel %vm219, %v230, %v232
  %v236 = vsel %vm219, %v232, %v234
  %v239 = vmax.f32 %v148, %v235
  %v240 = vmax.f32 %v168, %v236
  %243 = vrot.lane.b32.xlu0 %v239, 120
  %v244 = vpop.permute.xlu0 %243
  %245 = vrot.lane.b32.xlu0 %v240, 120
  %v246 = vpop.permute.xlu0 %245
  %vm247 = vcmask 982016
  %v248 = vsel %vm247, %v244, %v246
  %v251 = vmax.f32 %v224, %v248
  %v252 = vmax.f32 %v225, %v246
  %254 = vset.pattern.permute.xlu0 0
  %255 = vperm.xlu0 %254, %v21
  %v256 = vpop.permute.xlu0 %255
  %v258 = vadd.f32 %v251, %v256
  %v259 = vadd.f32 %v252, %v256
  %v260 = vmax.f32 %v258, 0.0
  %v261 = vmax.f32 %v259, 0.0
  %s262 = scalar_lea.vmem %s0, 56
  %v263 = vld [vmem:[%s262] sm:$0xff]
  %v264 = vld [vmem:[%s262 + $0x8] sm:$0xff]
  %v265 = vld [vmem:[%s262 + $0x10] sm:$0xff]
  %v266 = vld [vmem:[%s262 + $0x18] sm:$0xf]
  %v267 = vld [vmem:[%s262 + $0x1c] sm:$0x11]
  %v268 = vld [vmem:[%s262 + $0x24] sm:$0x11]
  %v269 = vld [vmem:[%s262 + $0x2c] sm:$0x11]
  %v270 = vld [vmem:[%s262 + $0x34] sm:$0x1]
  %v271 = vunpack.c.l.bf16 %v263
  %v272 = vunpack.c.h.bf16 %v263
  %v273 = vunpack.c.l.bf16 %v264
  %v274 = vunpack.c.h.bf16 %v264
  %v275 = vunpack.c.l.bf16 %v265
  %v276 = vunpack.c.h.bf16 %v265
  %v277 = vunpack.c.l.bf16 %v266
  %v278 = vunpack.c.l.bf16 %v267
  %v279 = vunpack.c.h.bf16 %v267
  %v280 = vunpack.c.l.bf16 %v268
  %v281 = vunpack.c.h.bf16 %v268
  %v282 = vunpack.c.l.bf16 %v269
  %v283 = vunpack.c.h.bf16 %v269
  %v284 = vunpack.c.l.bf16 %v270
  %v286 = vsel %vm48, %v278, 0
  %v289 = vsel %vm48, %v279, 0
  %v292 = vsel %vm48, %v280, 0
  %v295 = vsel %vm48, %v281, 0
  %v298 = vsel %vm48, %v282, 0
  %v301 = vsel %vm48, %v283, 0
  %v304 = vsel %vm48, %v284, 0
  %306 = vmatpush.msra.mxu0 0.0
  %307 = vmatpush.msra.mxu0 0.0
  %308 = vmatpush.msra.mxu0 0.0
  %309 = vmatpush.msra.mxu0 0.0
  %310 = vmatpush.msra.mxu0 0.0
  %311 = vmatpush.msra.mxu0 0.0
  %312 = vmatpush.msra.mxu0 0.0
  %313 = vmatpush.msra.mxu0 0.0
  %314 = vmatpush.msra.mxu0 0.0
  %315 = vmatpush.msra.mxu0 0.0
  %316 = vmatpush.msra.mxu0 0.0
  %317 = vmatpush.msra.mxu0 0.0
  %318 = vmatpush.msra.mxu0 0.0
  %319 = vmatpush.msra.mxu0 0.0
  %320 = vmatpush.msra.mxu0 %v286
  %321 = vmatpush.msra.mxu0 %v271
  %322 = vmatmul.f32.gmra.mxu0 %v46
  %v323 = vpop.f32.mrf.mxu0
  %v324 = vadd.f32 0.0, %v323
  %325 = vdwg.mxu0
  %326 = vmatpush.msra.mxu0 0.0
  %327 = vmatpush.msra.mxu0 0.0
  %328 = vmatpush.msra.mxu0 0.0
  %329 = vmatpush.msra.mxu0 0.0
  %330 = vmatpush.msra.mxu0 0.0
  %331 = vmatpush.msra.mxu0 0.0
  %332 = vmatpush.msra.mxu0 0.0
  %333 = vmatpush.msra.mxu0 0.0
  %334 = vmatpush.msra.mxu0 0.0
  %335 = vmatpush.msra.mxu0 0.0
  %336 = vmatpush.msra.mxu0 0.0
  %337 = vmatpush.msra.mxu0 0.0
  %338 = vmatpush.msra.mxu0 0.0
  %339 = vmatpush.msra.mxu0 0.0
  %340 = vmatpush.msra.mxu0 %v289
  %341 = vmatpush.msra.mxu0 %v272
  %342 = vmatmul.f32.gmra.mxu0 %v46
  %v343 = vpop.f32.mrf.mxu0
  %v344 = vadd.f32 0.0, %v343
  %345 = vdwg.mxu0
  %346 = vmatpush.msra.mxu0 0.0
  %347 = vmatpush.msra.mxu0 0.0
  %348 = vmatpush.msra.mxu0 0.0
  %349 = vmatpush.msra.mxu0 0.0
  %350 = vmatpush.msra.mxu0 0.0
  %351 = vmatpush.msra.mxu0 0.0
  %352 = vmatpush.msra.mxu0 0.0
  %353 = vmatpush.msra.mxu0 0.0
  %354 = vmatpush.msra.mxu0 0.0
  %355 = vmatpush.msra.mxu0 0.0
  %356 = vmatpush.msra.mxu0 0.0
  %357 = vmatpush.msra.mxu0 0.0
  %358 = vmatpush.msra.mxu0 0.0
  %359 = vmatpush.msra.mxu0 0.0
  %360 = vmatpush.msra.mxu0 %v292
  %361 = vmatpush.msra.mxu0 %v273
  %362 = vmatmul.f32.gmra.mxu0 %v46
  %v363 = vpop.f32.mrf.mxu0
  %v364 = vadd.f32 0.0, %v363
  %365 = vdwg.mxu0
  %366 = vmatpush.msra.mxu0 0.0
  %367 = vmatpush.msra.mxu0 0.0
  %368 = vmatpush.msra.mxu0 0.0
  %369 = vmatpush.msra.mxu0 0.0
  %370 = vmatpush.msra.mxu0 0.0
  %371 = vmatpush.msra.mxu0 0.0
  %372 = vmatpush.msra.mxu0 0.0
  %373 = vmatpush.msra.mxu0 0.0
  %374 = vmatpush.msra.mxu0 0.0
  %375 = vmatpush.msra.mxu0 0.0
  %376 = vmatpush.msra.mxu0 0.0
  %377 = vmatpush.msra.mxu0 0.0
  %378 = vmatpush.msra.mxu0 0.0
  %379 = vmatpush.msra.mxu0 0.0
  %380 = vmatpush.msra.mxu0 %v295
  %381 = vmatpush.msra.mxu0 %v274
  %382 = vmatmul.f32.gmra.mxu0 %v46
  %v383 = vpop.f32.mrf.mxu0
  %v384 = vadd.f32 0.0, %v383
  %385 = vdwg.mxu0
  %386 = vmatpush.msra.mxu0 0.0
  %387 = vmatpush.msra.mxu0 0.0
  %388 = vmatpush.msra.mxu0 0.0
  %389 = vmatpush.msra.mxu0 0.0
  %390 = vmatpush.msra.mxu0 0.0
  %391 = vmatpush.msra.mxu0 0.0
  %392 = vmatpush.msra.mxu0 0.0
  %393 = vmatpush.msra.mxu0 0.0
  %394 = vmatpush.msra.mxu0 0.0
  %395 = vmatpush.msra.mxu0 0.0
  %396 = vmatpush.msra.mxu0 0.0
  %397 = vmatpush.msra.mxu0 0.0
  %398 = vmatpush.msra.mxu0 0.0
  %399 = vmatpush.msra.mxu0 0.0
  %400 = vmatpush.msra.mxu0 %v298
  %401 = vmatpush.msra.mxu0 %v275
  %402 = vmatmul.f32.gmra.mxu0 %v46
  %v403 = vpop.f32.mrf.mxu0
  %v404 = vadd.f32 0.0, %v403
  %405 = vdwg.mxu0
  %406 = vmatpush.msra.mxu0 0.0
  %407 = vmatpush.msra.mxu0 0.0
  %408 = vmatpush.msra.mxu0 0.0
  %409 = vmatpush.msra.mxu0 0.0
  %410 = vmatpush.msra.mxu0 0.0
  %411 = vmatpush.msra.mxu0 0.0
  %412 = vmatpush.msra.mxu0 0.0
  %413 = vmatpush.msra.mxu0 0.0
  %414 = vmatpush.msra.mxu0 0.0
  %415 = vmatpush.msra.mxu0 0.0
  %416 = vmatpush.msra.mxu0 0.0
  %417 = vmatpush.msra.mxu0 0.0
  %418 = vmatpush.msra.mxu0 0.0
  %419 = vmatpush.msra.mxu0 0.0
  %420 = vmatpush.msra.mxu0 %v301
  %421 = vmatpush.msra.mxu0 %v276
  %422 = vmatmul.f32.gmra.mxu0 %v46
  %v423 = vpop.f32.mrf.mxu0
  %v424 = vadd.f32 0.0, %v423
  %425 = vdwg.mxu0
  %426 = vmatpush.msra.mxu0 0.0
  %427 = vmatpush.msra.mxu0 0.0
  %428 = vmatpush.msra.mxu0 0.0
  %429 = vmatpush.msra.mxu0 0.0
  %430 = vmatpush.msra.mxu0 0.0
  %431 = vmatpush.msra.mxu0 0.0
  %432 = vmatpush.msra.mxu0 0.0
  %433 = vmatpush.msra.mxu0 0.0
  %434 = vmatpush.msra.mxu0 0.0
  %435 = vmatpush.msra.mxu0 0.0
  %436 = vmatpush.msra.mxu0 0.0
  %437 = vmatpush.msra.mxu0 0.0
  %438 = vmatpush.msra.mxu0 0.0
  %439 = vmatpush.msra.mxu0 0.0
  %440 = vmatpush.msra.mxu0 %v304
  %441 = vmatpush.msra.mxu0 %v277
  %442 = vmatmul.f32.gmra.mxu0 %v46
  %v443 = vpop.f32.mrf.mxu0
  %v444 = vadd.f32 0.0, %v443
  %445 = vdwg.mxu0
  %449 = vrot.lane.b32.xlu0 %v344, 60
  %v450 = vpop.permute.xlu0 %449
  %451 = vrot.lane.b32.xlu0 %v364, 60
  %v452 = vpop.permute.xlu0 %451
  %453 = vrot.lane.b32.xlu0 %v384, 60
  %v454 = vpop.permute.xlu0 %453
  %v455 = vsel %vm219, %v450, %v452
  %v456 = vsel %vm219, %v452, %v454
  %v459 = vmax.f32 %v324, %v455
  %v460 = vmax.f32 %v344, %v456
  %464 = vrot.lane.b32.xlu0 %v404, 60
  %v465 = vpop.permute.xlu0 %464
  %466 = vrot.lane.b32.xlu0 %v424, 60
  %v467 = vpop.permute.xlu0 %466
  %468 = vrot.lane.b32.xlu0 %v444, 60
  %v469 = vpop.permute.xlu0 %468
  %v470 = vsel %vm219, %v465, %v467
  %v471 = vsel %vm219, %v467, %v469
  %v474 = vmax.f32 %v384, %v470
  %v475 = vmax.f32 %v404, %v471
  %478 = vrot.lane.b32.xlu0 %v474, 120
  %v479 = vpop.permute.xlu0 %478
  %480 = vrot.lane.b32.xlu0 %v475, 120
  %v481 = vpop.permute.xlu0 %480
  %v482 = vsel %vm247, %v479, %v481
  %v485 = vmax.f32 %v459, %v482
  %v486 = vmax.f32 %v460, %v481
  %v487 = vadd.f32 %v485, %v256
  %v488 = vadd.f32 %v486, %v256
  %v489 = vmax.f32 %v487, 0.0
  %v490 = vmax.f32 %v488, 0.0
  %s491 = scalar_lea.vmem %s0, 112
  %v492 = vld [vmem:[%s491] sm:$0xff]
  %v493 = vld [vmem:[%s491 + $0x8] sm:$0xff]
  %v494 = vld [vmem:[%s491 + $0x10] sm:$0xff]
  %v495 = vld [vmem:[%s491 + $0x18] sm:$0xf]
  %v496 = vld [vmem:[%s491 + $0x1c] sm:$0x11]
  %v497 = vld [vmem:[%s491 + $0x24] sm:$0x11]
  %v498 = vld [vmem:[%s491 + $0x2c] sm:$0x11]
  %v499 = vld [vmem:[%s491 + $0x34] sm:$0x1]
  %v500 = vunpack.c.l.bf16 %v492
  %v501 = vunpack.c.h.bf16 %v492
  %v502 = vunpack.c.l.bf16 %v493
  %v503 = vunpack.c.h.bf16 %v493
  %v504 = vunpack.c.l.bf16 %v494
  %v505 = vunpack.c.h.bf16 %v494
  %v506 = vunpack.c.l.bf16 %v495
  %v507 = vunpack.c.l.bf16 %v496
  %v508 = vunpack.c.h.bf16 %v496
  %v509 = vunpack.c.l.bf16 %v497
  %v510 = vunpack.c.h.bf16 %v497
  %v511 = vunpack.c.l.bf16 %v498
  %v512 = vunpack.c.h.bf16 %v498
  %v513 = vunpack.c.l.bf16 %v499
  %v515 = vsel %vm48, %v507, 0
  %v518 = vsel %vm48, %v508, 0
  %v521 = vsel %vm48, %v509, 0
  %v524 = vsel %vm48, %v510, 0
  %v527 = vsel %vm48, %v511, 0
  %v530 = vsel %vm48, %v512, 0
  %v533 = vsel %vm48, %v513, 0
  %535 = vmatpush.msra.mxu0 0.0
  %536 = vmatpush.msra.mxu0 0.0
  %537 = vmatpush.msra.mxu0 0.0
  %538 = vmatpush.msra.mxu0 0.0
  %539 = vmatpush.msra.mxu0 0.0
  %540 = vmatpush.msra.mxu0 0.0
  %541 = vmatpush.msra.mxu0 0.0
  %542 = vmatpush.msra.mxu0 0.0
  %543 = vmatpush.msra.mxu0 0.0
  %544 = vmatpush.msra.mxu0 0.0
  %545 = vmatpush.msra.mxu0 0.0
  %546 = vmatpush.msra.mxu0 0.0
  %547 = vmatpush.msra.mxu0 0.0
  %548 = vmatpush.msra.mxu0 0.0
  %549 = vmatpush.msra.mxu0 %v515
  %550 = vmatpush.msra.mxu0 %v500
  %551 = vmatmul.f32.gmra.mxu0 %v46
  %v552 = vpop.f32.mrf.mxu0
  %v553 = vadd.f32 0.0, %v552
  %554 = vdwg.mxu0
  %555 = vmatpush.msra.mxu0 0.0
  %556 = vmatpush.msra.mxu0 0.0
  %557 = vmatpush.msra.mxu0 0.0
  %558 = vmatpush.msra.mxu0 0.0
  %559 = vmatpush.msra.mxu0 0.0
  %560 = vmatpush.msra.mxu0 0.0
  %561 = vmatpush.msra.mxu0 0.0
  %562 = vmatpush.msra.mxu0 0.0
  %563 = vmatpush.msra.mxu0 0.0
  %564 = vmatpush.msra.mxu0 0.0
  %565 = vmatpush.msra.mxu0 0.0
  %566 = vmatpush.msra.mxu0 0.0
  %567 = vmatpush.msra.mxu0 0.0
  %568 = vmatpush.msra.mxu0 0.0
  %569 = vmatpush.msra.mxu0 %v518
  %570 = vmatpush.msra.mxu0 %v501
  %571 = vmatmul.f32.gmra.mxu0 %v46
  %v572 = vpop.f32.mrf.mxu0
  %v573 = vadd.f32 0.0, %v572
  %574 = vdwg.mxu0
  %575 = vmatpush.msra.mxu0 0.0
  %576 = vmatpush.msra.mxu0 0.0
  %577 = vmatpush.msra.mxu0 0.0
  %578 = vmatpush.msra.mxu0 0.0
  %579 = vmatpush.msra.mxu0 0.0
  %580 = vmatpush.msra.mxu0 0.0
  %581 = vmatpush.msra.mxu0 0.0
  %582 = vmatpush.msra.mxu0 0.0
  %583 = vmatpush.msra.mxu0 0.0
  %584 = vmatpush.msra.mxu0 0.0
  %585 = vmatpush.msra.mxu0 0.0
  %586 = vmatpush.msra.mxu0 0.0
  %587 = vmatpush.msra.mxu0 0.0
  %588 = vmatpush.msra.mxu0 0.0
  %589 = vmatpush.msra.mxu0 %v521
  %590 = vmatpush.msra.mxu0 %v502
  %591 = vmatmul.f32.gmra.mxu0 %v46
  %v592 = vpop.f32.mrf.mxu0
  %v593 = vadd.f32 0.0, %v592
  %594 = vdwg.mxu0
  %595 = vmatpush.msra.mxu0 0.0
  %596 = vmatpush.msra.mxu0 0.0
  %597 = vmatpush.msra.mxu0 0.0
  %598 = vmatpush.msra.mxu0 0.0
  %599 = vmatpush.msra.mxu0 0.0
  %600 = vmatpush.msra.mxu0 0.0
  %601 = vmatpush.msra.mxu0 0.0
  %602 = vmatpush.msra.mxu0 0.0
  %603 = vmatpush.msra.mxu0 0.0
  %604 = vmatpush.msra.mxu0 0.0
  %605 = vmatpush.msra.mxu0 0.0
  %606 = vmatpush.msra.mxu0 0.0
  %607 = vmatpush.msra.mxu0 0.0
  %608 = vmatpush.msra.mxu0 0.0
  %609 = vmatpush.msra.mxu0 %v524
  %610 = vmatpush.msra.mxu0 %v503
  %611 = vmatmul.f32.gmra.mxu0 %v46
  %v612 = vpop.f32.mrf.mxu0
  %v613 = vadd.f32 0.0, %v612
  %614 = vdwg.mxu0
  %615 = vmatpush.msra.mxu0 0.0
  %616 = vmatpush.msra.mxu0 0.0
  %617 = vmatpush.msra.mxu0 0.0
  %618 = vmatpush.msra.mxu0 0.0
  %619 = vmatpush.msra.mxu0 0.0
  %620 = vmatpush.msra.mxu0 0.0
  %621 = vmatpush.msra.mxu0 0.0
  %622 = vmatpush.msra.mxu0 0.0
  %623 = vmatpush.msra.mxu0 0.0
  %624 = vmatpush.msra.mxu0 0.0
  %625 = vmatpush.msra.mxu0 0.0
  %626 = vmatpush.msra.mxu0 0.0
  %627 = vmatpush.msra.mxu0 0.0
  %628 = vmatpush.msra.mxu0 0.0
  %629 = vmatpush.msra.mxu0 %v527
  %630 = vmatpush.msra.mxu0 %v504
  %631 = vmatmul.f32.gmra.mxu0 %v46
  %v632 = vpop.f32.mrf.mxu0
  %v633 = vadd.f32 0.0, %v632
  %634 = vdwg.mxu0
  %635 = vmatpush.msra.mxu0 0.0
  %636 = vmatpush.msra.mxu0 0.0
  %637 = vmatpush.msra.mxu0 0.0
  %638 = vmatpush.msra.mxu0 0.0
  %639 = vmatpush.msra.mxu0 0.0
  %640 = vmatpush.msra.mxu0 0.0
  %641 = vmatpush.msra.mxu0 0.0
  %642 = vmatpush.msra.mxu0 0.0
  %643 = vmatpush.msra.mxu0 0.0
  %644 = vmatpush.msra.mxu0 0.0
  %645 = vmatpush.msra.mxu0 0.0
  %646 = vmatpush.msra.mxu0 0.0
  %647 = vmatpush.msra.mxu0 0.0
  %648 = vmatpush.msra.mxu0 0.0
  %649 = vmatpush.msra.mxu0 %v530
  %650 = vmatpush.msra.mxu0 %v505
  %651 = vmatmul.f32.gmra.mxu0 %v46
  %v652 = vpop.f32.mrf.mxu0
  %v653 = vadd.f32 0.0, %v652
  %654 = vdwg.mxu0
  %655 = vmatpush.msra.mxu0 0.0
  %656 = vmatpush.msra.mxu0 0.0
  %657 = vmatpush.msra.mxu0 0.0
  %658 = vmatpush.msra.mxu0 0.0
  %659 = vmatpush.msra.mxu0 0.0
  %660 = vmatpush.msra.mxu0 0.0
  %661 = vmatpush.msra.mxu0 0.0
  %662 = vmatpush.msra.mxu0 0.0
  %663 = vmatpush.msra.mxu0 0.0
  %664 = vmatpush.msra.mxu0 0.0
  %665 = vmatpush.msra.mxu0 0.0
  %666 = vmatpush.msra.mxu0 0.0
  %667 = vmatpush.msra.mxu0 0.0
  %668 = vmatpush.msra.mxu0 0.0
  %669 = vmatpush.msra.mxu0 %v533
  %670 = vmatpush.msra.mxu0 %v506
  %671 = vmatmul.f32.gmra.mxu0 %v46
  %v672 = vpop.f32.mrf.mxu0
  %v673 = vadd.f32 0.0, %v672
  %674 = vdwg.mxu0
  %678 = vrot.lane.b32.xlu0 %v573, 60
  %v679 = vpop.permute.xlu0 %678
  %680 = vrot.lane.b32.xlu0 %v593, 60
  %v681 = vpop.permute.xlu0 %680
  %682 = vrot.lane.b32.xlu0 %v613, 60
  %v683 = vpop.permute.xlu0 %682
  %v684 = vsel %vm219, %v679, %v681
  %v685 = vsel %vm219, %v681, %v683
  %v688 = vmax.f32 %v553, %v684
  %v689 = vmax.f32 %v573, %v685
  %693 = vrot.lane.b32.xlu0 %v633, 60
  %v694 = vpop.permute.xlu0 %693
  %695 = vrot.lane.b32.xlu0 %v653, 60
  %v696 = vpop.permute.xlu0 %695
  %697 = vrot.lane.b32.xlu0 %v673, 60
  %v698 = vpop.permute.xlu0 %697
  %v699 = vsel %vm219, %v694, %v696
  %v700 = vsel %vm219, %v696, %v698
  %v703 = vmax.f32 %v613, %v699
  %v704 = vmax.f32 %v633, %v700
  %707 = vrot.lane.b32.xlu0 %v703, 120
  %v708 = vpop.permute.xlu0 %707
  %709 = vrot.lane.b32.xlu0 %v704, 120
  %v710 = vpop.permute.xlu0 %709
  %v711 = vsel %vm247, %v708, %v710
  %v714 = vmax.f32 %v688, %v711
  %v715 = vmax.f32 %v689, %v710
  %v716 = vadd.f32 %v714, %v256
  %v717 = vadd.f32 %v715, %v256
  %v718 = vmax.f32 %v716, 0.0
  %v719 = vmax.f32 %v717, 0.0
  %s720 = scalar_lea.vmem %s0, 168
  %v721 = vld [vmem:[%s720] sm:$0xff]
  %v722 = vld [vmem:[%s720 + $0x8] sm:$0xff]
  %v723 = vld [vmem:[%s720 + $0x10] sm:$0xff]
  %v724 = vld [vmem:[%s720 + $0x18] sm:$0xf]
  %v725 = vld [vmem:[%s720 + $0x1c] sm:$0x11]
  %v726 = vld [vmem:[%s720 + $0x24] sm:$0x11]
  %v727 = vld [vmem:[%s720 + $0x2c] sm:$0x11]
  %v728 = vld [vmem:[%s720 + $0x34] sm:$0x1]
  %v729 = vunpack.c.l.bf16 %v721
  %v730 = vunpack.c.h.bf16 %v721
  %v731 = vunpack.c.l.bf16 %v722
  %v732 = vunpack.c.h.bf16 %v722
  %v733 = vunpack.c.l.bf16 %v723
  %v734 = vunpack.c.h.bf16 %v723
  %v735 = vunpack.c.l.bf16 %v724
  %v736 = vunpack.c.l.bf16 %v725
  %v737 = vunpack.c.h.bf16 %v725
  %v738 = vunpack.c.l.bf16 %v726
  %v739 = vunpack.c.h.bf16 %v726
  %v740 = vunpack.c.l.bf16 %v727
  %v741 = vunpack.c.h.bf16 %v727
  %v742 = vunpack.c.l.bf16 %v728
  %v744 = vsel %vm48, %v736, 0
  %v747 = vsel %vm48, %v737, 0
  %v750 = vsel %vm48, %v738, 0
  %v753 = vsel %vm48, %v739, 0
  %v756 = vsel %vm48, %v740, 0
  %v759 = vsel %vm48, %v741, 0
  %v762 = vsel %vm48, %v742, 0
  %764 = vmatpush.msra.mxu0 0.0
  %765 = vmatpush.msra.mxu0 0.0
  %766 = vmatpush.msra.mxu0 0.0
  %767 = vmatpush.msra.mxu0 0.0
  %768 = vmatpush.msra.mxu0 0.0
  %769 = vmatpush.msra.mxu0 0.0
  %770 = vmatpush.msra.mxu0 0.0
  %771 = vmatpush.msra.mxu0 0.0
  %772 = vmatpush.msra.mxu0 0.0
  %773 = vmatpush.msra.mxu0 0.0
  %774 = vmatpush.msra.mxu0 0.0
  %775 = vmatpush.msra.mxu0 0.0
  %776 = vmatpush.msra.mxu0 0.0
  %777 = vmatpush.msra.mxu0 0.0
  %778 = vmatpush.msra.mxu0 %v744
  %779 = vmatpush.msra.mxu0 %v729
  %780 = vmatmul.f32.gmra.mxu0 %v46
  %v781 = vpop.f32.mrf.mxu0
  %v782 = vadd.f32 0.0, %v781
  %783 = vdwg.mxu0
  %784 = vmatpush.msra.mxu0 0.0
  %785 = vmatpush.msra.mxu0 0.0
  %786 = vmatpush.msra.mxu0 0.0
  %787 = vmatpush.msra.mxu0 0.0
  %788 = vmatpush.msra.mxu0 0.0
  %789 = vmatpush.msra.mxu0 0.0
  %790 = vmatpush.msra.mxu0 0.0
  %791 = vmatpush.msra.mxu0 0.0
  %792 = vmatpush.msra.mxu0 0.0
  %793 = vmatpush.msra.mxu0 0.0
  %794 = vmatpush.msra.mxu0 0.0
  %795 = vmatpush.msra.mxu0 0.0
  %796 = vmatpush.msra.mxu0 0.0
  %797 = vmatpush.msra.mxu0 0.0
  %798 = vmatpush.msra.mxu0 %v747
  %799 = vmatpush.msra.mxu0 %v730
  %800 = vmatmul.f32.gmra.mxu0 %v46
  %v801 = vpop.f32.mrf.mxu0
  %v802 = vadd.f32 0.0, %v801
  %803 = vdwg.mxu0
  %804 = vmatpush.msra.mxu0 0.0
  %805 = vmatpush.msra.mxu0 0.0
  %806 = vmatpush.msra.mxu0 0.0
  %807 = vmatpush.msra.mxu0 0.0
  %808 = vmatpush.msra.mxu0 0.0
  %809 = vmatpush.msra.mxu0 0.0
  %810 = vmatpush.msra.mxu0 0.0
  %811 = vmatpush.msra.mxu0 0.0
  %812 = vmatpush.msra.mxu0 0.0
  %813 = vmatpush.msra.mxu0 0.0
  %814 = vmatpush.msra.mxu0 0.0
  %815 = vmatpush.msra.mxu0 0.0
  %816 = vmatpush.msra.mxu0 0.0
  %817 = vmatpush.msra.mxu0 0.0
  %818 = vmatpush.msra.mxu0 %v750
  %819 = vmatpush.msra.mxu0 %v731
  %820 = vmatmul.f32.gmra.mxu0 %v46
  %v821 = vpop.f32.mrf.mxu0
  %v822 = vadd.f32 0.0, %v821
  %823 = vdwg.mxu0
  %824 = vmatpush.msra.mxu0 0.0
  %825 = vmatpush.msra.mxu0 0.0
  %826 = vmatpush.msra.mxu0 0.0
  %827 = vmatpush.msra.mxu0 0.0
  %828 = vmatpush.msra.mxu0 0.0
  %829 = vmatpush.msra.mxu0 0.0
  %830 = vmatpush.msra.mxu0 0.0
  %831 = vmatpush.msra.mxu0 0.0
  %832 = vmatpush.msra.mxu0 0.0
  %833 = vmatpush.msra.mxu0 0.0
  %834 = vmatpush.msra.mxu0 0.0
  %835 = vmatpush.msra.mxu0 0.0
  %836 = vmatpush.msra.mxu0 0.0
  %837 = vmatpush.msra.mxu0 0.0
  %838 = vmatpush.msra.mxu0 %v753
  %839 = vmatpush.msra.mxu0 %v732
  %840 = vmatmul.f32.gmra.mxu0 %v46
  %v841 = vpop.f32.mrf.mxu0
  %v842 = vadd.f32 0.0, %v841
  %843 = vdwg.mxu0
  %844 = vmatpush.msra.mxu0 0.0
  %845 = vmatpush.msra.mxu0 0.0
  %846 = vmatpush.msra.mxu0 0.0
  %847 = vmatpush.msra.mxu0 0.0
  %848 = vmatpush.msra.mxu0 0.0
  %849 = vmatpush.msra.mxu0 0.0
  %850 = vmatpush.msra.mxu0 0.0
  %851 = vmatpush.msra.mxu0 0.0
  %852 = vmatpush.msra.mxu0 0.0
  %853 = vmatpush.msra.mxu0 0.0
  %854 = vmatpush.msra.mxu0 0.0
  %855 = vmatpush.msra.mxu0 0.0
  %856 = vmatpush.msra.mxu0 0.0
  %857 = vmatpush.msra.mxu0 0.0
  %858 = vmatpush.msra.mxu0 %v756
  %859 = vmatpush.msra.mxu0 %v733
  %860 = vmatmul.f32.gmra.mxu0 %v46
  %v861 = vpop.f32.mrf.mxu0
  %v862 = vadd.f32 0.0, %v861
  %863 = vdwg.mxu0
  %864 = vmatpush.msra.mxu0 0.0
  %865 = vmatpush.msra.mxu0 0.0
  %866 = vmatpush.msra.mxu0 0.0
  %867 = vmatpush.msra.mxu0 0.0
  %868 = vmatpush.msra.mxu0 0.0
  %869 = vmatpush.msra.mxu0 0.0
  %870 = vmatpush.msra.mxu0 0.0
  %871 = vmatpush.msra.mxu0 0.0
  %872 = vmatpush.msra.mxu0 0.0
  %873 = vmatpush.msra.mxu0 0.0
  %874 = vmatpush.msra.mxu0 0.0
  %875 = vmatpush.msra.mxu0 0.0
  %876 = vmatpush.msra.mxu0 0.0
  %877 = vmatpush.msra.mxu0 0.0
  %878 = vmatpush.msra.mxu0 %v759
  %879 = vmatpush.msra.mxu0 %v734
  %880 = vmatmul.f32.gmra.mxu0 %v46
  %v881 = vpop.f32.mrf.mxu0
  %v882 = vadd.f32 0.0, %v881
  %883 = vdwg.mxu0
  %884 = vmatpush.msra.mxu0 0.0
  %885 = vmatpush.msra.mxu0 0.0
  %886 = vmatpush.msra.mxu0 0.0
  %887 = vmatpush.msra.mxu0 0.0
  %888 = vmatpush.msra.mxu0 0.0
  %889 = vmatpush.msra.mxu0 0.0
  %890 = vmatpush.msra.mxu0 0.0
  %891 = vmatpush.msra.mxu0 0.0
  %892 = vmatpush.msra.mxu0 0.0
  %893 = vmatpush.msra.mxu0 0.0
  %894 = vmatpush.msra.mxu0 0.0
  %895 = vmatpush.msra.mxu0 0.0
  %896 = vmatpush.msra.mxu0 0.0
  %897 = vmatpush.msra.mxu0 0.0
  %898 = vmatpush.msra.mxu0 %v762
  %899 = vmatpush.msra.mxu0 %v735
  %900 = vmatmul.f32.gmra.mxu0 %v46
  %v901 = vpop.f32.mrf.mxu0
  %v902 = vadd.f32 0.0, %v901
  %903 = vdwg.mxu0
  %907 = vrot.lane.b32.xlu0 %v802, 60
  %v908 = vpop.permute.xlu0 %907
  %909 = vrot.lane.b32.xlu0 %v822, 60
  %v910 = vpop.permute.xlu0 %909
  %911 = vrot.lane.b32.xlu0 %v842, 60
  %v912 = vpop.permute.xlu0 %911
  %v913 = vsel %vm219, %v908, %v910
  %v914 = vsel %vm219, %v910, %v912
  %v917 = vmax.f32 %v782, %v913
  %v918 = vmax.f32 %v802, %v914
  %922 = vrot.lane.b32.xlu0 %v862, 60
  %v923 = vpop.permute.xlu0 %922
  %924 = vrot.lane.b32.xlu0 %v882, 60
  %v925 = vpop.permute.xlu0 %924
  %926 = vrot.lane.b32.xlu0 %v902, 60
  %v927 = vpop.permute.xlu0 %926
  %v928 = vsel %vm219, %v923, %v925
  %v929 = vsel %vm219, %v925, %v927
  %v932 = vmax.f32 %v842, %v928
  %v933 = vmax.f32 %v862, %v929
  %936 = vrot.lane.b32.xlu0 %v932, 120
  %v937 = vpop.permute.xlu0 %936
  %938 = vrot.lane.b32.xlu0 %v933, 120
  %v939 = vpop.permute.xlu0 %938
  %v940 = vsel %vm247, %v937, %v939
  %v943 = vmax.f32 %v917, %v940
  %v944 = vmax.f32 %v918, %v939
  %v945 = vadd.f32 %v943, %v256
  %v946 = vadd.f32 %v944, %v256
  %v947 = vmax.f32 %v945, 0.0
  %v948 = vmax.f32 %v946, 0.0
  %s949 = scalar_lea.vmem %s0, 224
  %v950 = vld [vmem:[%s949] sm:$0xff]
  %v951 = vld [vmem:[%s949 + $0x8] sm:$0xff]
  %v952 = vld [vmem:[%s949 + $0x10] sm:$0xff]
  %v953 = vld [vmem:[%s949 + $0x18] sm:$0xf]
  %v954 = vld [vmem:[%s949 + $0x1c] sm:$0x11]
  %v955 = vld [vmem:[%s949 + $0x24] sm:$0x11]
  %v956 = vld [vmem:[%s949 + $0x2c] sm:$0x11]
  %v957 = vld [vmem:[%s949 + $0x34] sm:$0x1]
  %v958 = vunpack.c.l.bf16 %v950
  %v959 = vunpack.c.h.bf16 %v950
  %v960 = vunpack.c.l.bf16 %v951
  %v961 = vunpack.c.h.bf16 %v951
  %v962 = vunpack.c.l.bf16 %v952
  %v963 = vunpack.c.h.bf16 %v952
  %v964 = vunpack.c.l.bf16 %v953
  %v965 = vunpack.c.l.bf16 %v954
  %v966 = vunpack.c.h.bf16 %v954
  %v967 = vunpack.c.l.bf16 %v955
  %v968 = vunpack.c.h.bf16 %v955
  %v969 = vunpack.c.l.bf16 %v956
  %v970 = vunpack.c.h.bf16 %v956
  %v971 = vunpack.c.l.bf16 %v957
  %v973 = vsel %vm48, %v965, 0
  %v976 = vsel %vm48, %v966, 0
  %v979 = vsel %vm48, %v967, 0
  %v982 = vsel %vm48, %v968, 0
  %v985 = vsel %vm48, %v969, 0
  %v988 = vsel %vm48, %v970, 0
  %v991 = vsel %vm48, %v971, 0
  %993 = vmatpush.msra.mxu0 0.0
  %994 = vmatpush.msra.mxu0 0.0
  %995 = vmatpush.msra.mxu0 0.0
  %996 = vmatpush.msra.mxu0 0.0
  %997 = vmatpush.msra.mxu0 0.0
  %998 = vmatpush.msra.mxu0 0.0
  %999 = vmatpush.msra.mxu0 0.0
  %1000 = vmatpush.msra.mxu0 0.0
  %1001 = vmatpush.msra.mxu0 0.0
  %1002 = vmatpush.msra.mxu0 0.0
  %1003 = vmatpush.msra.mxu0 0.0
  %1004 = vmatpush.msra.mxu0 0.0
  %1005 = vmatpush.msra.mxu0 0.0
  %1006 = vmatpush.msra.mxu0 0.0
  %1007 = vmatpush.msra.mxu0 %v973
  %1008 = vmatpush.msra.mxu0 %v958
  %1009 = vmatmul.f32.gmra.mxu0 %v46
  %v1010 = vpop.f32.mrf.mxu0
  %v1011 = vadd.f32 0.0, %v1010
  %1012 = vdwg.mxu0
  %1013 = vmatpush.msra.mxu0 0.0
  %1014 = vmatpush.msra.mxu0 0.0
  %1015 = vmatpush.msra.mxu0 0.0
  %1016 = vmatpush.msra.mxu0 0.0
  %1017 = vmatpush.msra.mxu0 0.0
  %1018 = vmatpush.msra.mxu0 0.0
  %1019 = vmatpush.msra.mxu0 0.0
  %1020 = vmatpush.msra.mxu0 0.0
  %1021 = vmatpush.msra.mxu0 0.0
  %1022 = vmatpush.msra.mxu0 0.0
  %1023 = vmatpush.msra.mxu0 0.0
  %1024 = vmatpush.msra.mxu0 0.0
  %1025 = vmatpush.msra.mxu0 0.0
  %1026 = vmatpush.msra.mxu0 0.0
  %1027 = vmatpush.msra.mxu0 %v976
  %1028 = vmatpush.msra.mxu0 %v959
  %1029 = vmatmul.f32.gmra.mxu0 %v46
  %v1030 = vpop.f32.mrf.mxu0
  %v1031 = vadd.f32 0.0, %v1030
  %1032 = vdwg.mxu0
  %1033 = vmatpush.msra.mxu0 0.0
  %1034 = vmatpush.msra.mxu0 0.0
  %1035 = vmatpush.msra.mxu0 0.0
  %1036 = vmatpush.msra.mxu0 0.0
  %1037 = vmatpush.msra.mxu0 0.0
  %1038 = vmatpush.msra.mxu0 0.0
  %1039 = vmatpush.msra.mxu0 0.0
  %1040 = vmatpush.msra.mxu0 0.0
  %1041 = vmatpush.msra.mxu0 0.0
  %1042 = vmatpush.msra.mxu0 0.0
  %1043 = vmatpush.msra.mxu0 0.0
  %1044 = vmatpush.msra.mxu0 0.0
  %1045 = vmatpush.msra.mxu0 0.0
  %1046 = vmatpush.msra.mxu0 0.0
  %1047 = vmatpush.msra.mxu0 %v979
  %1048 = vmatpush.msra.mxu0 %v960
  %1049 = vmatmul.f32.gmra.mxu0 %v46
  %v1050 = vpop.f32.mrf.mxu0
  %v1051 = vadd.f32 0.0, %v1050
  %1052 = vdwg.mxu0
  %1053 = vmatpush.msra.mxu0 0.0
  %1054 = vmatpush.msra.mxu0 0.0
  %1055 = vmatpush.msra.mxu0 0.0
  %1056 = vmatpush.msra.mxu0 0.0
  %1057 = vmatpush.msra.mxu0 0.0
  %1058 = vmatpush.msra.mxu0 0.0
  %1059 = vmatpush.msra.mxu0 0.0
  %1060 = vmatpush.msra.mxu0 0.0
  %1061 = vmatpush.msra.mxu0 0.0
  %1062 = vmatpush.msra.mxu0 0.0
  %1063 = vmatpush.msra.mxu0 0.0
  %1064 = vmatpush.msra.mxu0 0.0
  %1065 = vmatpush.msra.mxu0 0.0
  %1066 = vmatpush.msra.mxu0 0.0
  %1067 = vmatpush.msra.mxu0 %v982
  %1068 = vmatpush.msra.mxu0 %v961
  %1069 = vmatmul.f32.gmra.mxu0 %v46
  %v1070 = vpop.f32.mrf.mxu0
  %v1071 = vadd.f32 0.0, %v1070
  %1072 = vdwg.mxu0
  %1073 = vmatpush.msra.mxu0 0.0
  %1074 = vmatpush.msra.mxu0 0.0
  %1075 = vmatpush.msra.mxu0 0.0
  %1076 = vmatpush.msra.mxu0 0.0
  %1077 = vmatpush.msra.mxu0 0.0
  %1078 = vmatpush.msra.mxu0 0.0
  %1079 = vmatpush.msra.mxu0 0.0
  %1080 = vmatpush.msra.mxu0 0.0
  %1081 = vmatpush.msra.mxu0 0.0
  %1082 = vmatpush.msra.mxu0 0.0
  %1083 = vmatpush.msra.mxu0 0.0
  %1084 = vmatpush.msra.mxu0 0.0
  %1085 = vmatpush.msra.mxu0 0.0
  %1086 = vmatpush.msra.mxu0 0.0
  %1087 = vmatpush.msra.mxu0 %v985
  %1088 = vmatpush.msra.mxu0 %v962
  %1089 = vmatmul.f32.gmra.mxu0 %v46
  %v1090 = vpop.f32.mrf.mxu0
  %v1091 = vadd.f32 0.0, %v1090
  %1092 = vdwg.mxu0
  %1093 = vmatpush.msra.mxu0 0.0
  %1094 = vmatpush.msra.mxu0 0.0
  %1095 = vmatpush.msra.mxu0 0.0
  %1096 = vmatpush.msra.mxu0 0.0
  %1097 = vmatpush.msra.mxu0 0.0
  %1098 = vmatpush.msra.mxu0 0.0
  %1099 = vmatpush.msra.mxu0 0.0
  %1100 = vmatpush.msra.mxu0 0.0
  %1101 = vmatpush.msra.mxu0 0.0
  %1102 = vmatpush.msra.mxu0 0.0
  %1103 = vmatpush.msra.mxu0 0.0
  %1104 = vmatpush.msra.mxu0 0.0
  %1105 = vmatpush.msra.mxu0 0.0
  %1106 = vmatpush.msra.mxu0 0.0
  %1107 = vmatpush.msra.mxu0 %v988
  %1108 = vmatpush.msra.mxu0 %v963
  %1109 = vmatmul.f32.gmra.mxu0 %v46
  %v1110 = vpop.f32.mrf.mxu0
  %v1111 = vadd.f32 0.0, %v1110
  %1112 = vdwg.mxu0
  %1113 = vmatpush.msra.mxu0 0.0
  %1114 = vmatpush.msra.mxu0 0.0
  %1115 = vmatpush.msra.mxu0 0.0
  %1116 = vmatpush.msra.mxu0 0.0
  %1117 = vmatpush.msra.mxu0 0.0
  %1118 = vmatpush.msra.mxu0 0.0
  %1119 = vmatpush.msra.mxu0 0.0
  %1120 = vmatpush.msra.mxu0 0.0
  %1121 = vmatpush.msra.mxu0 0.0
  %1122 = vmatpush.msra.mxu0 0.0
  %1123 = vmatpush.msra.mxu0 0.0
  %1124 = vmatpush.msra.mxu0 0.0
  %1125 = vmatpush.msra.mxu0 0.0
  %1126 = vmatpush.msra.mxu0 0.0
  %1127 = vmatpush.msra.mxu0 %v991
  %1128 = vmatpush.msra.mxu0 %v964
  %1129 = vmatmul.f32.gmra.mxu0 %v46
  %v1130 = vpop.f32.mrf.mxu0
  %v1131 = vadd.f32 0.0, %v1130
  %1132 = vdwg.mxu0
  %1136 = vrot.lane.b32.xlu0 %v1031, 60
  %v1137 = vpop.permute.xlu0 %1136
  %1138 = vrot.lane.b32.xlu0 %v1051, 60
  %v1139 = vpop.permute.xlu0 %1138
  %1140 = vrot.lane.b32.xlu0 %v1071, 60
  %v1141 = vpop.permute.xlu0 %1140
  %v1142 = vsel %vm219, %v1137, %v1139
  %v1143 = vsel %vm219, %v1139, %v1141
  %v1146 = vmax.f32 %v1011, %v1142
  %v1147 = vmax.f32 %v1031, %v1143
  %1151 = vrot.lane.b32.xlu0 %v1091, 60
  %v1152 = vpop.permute.xlu0 %1151
  %1153 = vrot.lane.b32.xlu0 %v1111, 60
  %v1154 = vpop.permute.xlu0 %1153
  %1155 = vrot.lane.b32.xlu0 %v1131, 60
  %v1156 = vpop.permute.xlu0 %1155
  %v1157 = vsel %vm219, %v1152, %v1154
  %v1158 = vsel %vm219, %v1154, %v1156
  %v1161 = vmax.f32 %v1071, %v1157
  %v1162 = vmax.f32 %v1091, %v1158
  %1165 = vrot.lane.b32.xlu0 %v1161, 120
  %v1166 = vpop.permute.xlu0 %1165
  %1167 = vrot.lane.b32.xlu0 %v1162, 120
  %v1168 = vpop.permute.xlu0 %1167
  %v1169 = vsel %vm247, %v1166, %v1168
  %v1172 = vmax.f32 %v1146, %v1169
  %v1173 = vmax.f32 %v1147, %v1168
  %v1174 = vadd.f32 %v1172, %v256
  %v1175 = vadd.f32 %v1173, %v256
  %v1176 = vmax.f32 %v1174, 0.0
  %v1177 = vmax.f32 %v1175, 0.0
  %s1178 = scalar_lea.vmem %s0, 280
  %v1179 = vld [vmem:[%s1178] sm:$0xff]
  %v1180 = vld [vmem:[%s1178 + $0x8] sm:$0xff]
  %v1181 = vld [vmem:[%s1178 + $0x10] sm:$0xff]
  %v1182 = vld [vmem:[%s1178 + $0x18] sm:$0xf]
  %v1183 = vld [vmem:[%s1178 + $0x1c] sm:$0x11]
  %v1184 = vld [vmem:[%s1178 + $0x24] sm:$0x11]
  %v1185 = vld [vmem:[%s1178 + $0x2c] sm:$0x11]
  %v1186 = vld [vmem:[%s1178 + $0x34] sm:$0x1]
  %v1187 = vunpack.c.l.bf16 %v1179
  %v1188 = vunpack.c.h.bf16 %v1179
  %v1189 = vunpack.c.l.bf16 %v1180
  %v1190 = vunpack.c.h.bf16 %v1180
  %v1191 = vunpack.c.l.bf16 %v1181
  %v1192 = vunpack.c.h.bf16 %v1181
  %v1193 = vunpack.c.l.bf16 %v1182
  %v1194 = vunpack.c.l.bf16 %v1183
  %v1195 = vunpack.c.h.bf16 %v1183
  %v1196 = vunpack.c.l.bf16 %v1184
  %v1197 = vunpack.c.h.bf16 %v1184
  %v1198 = vunpack.c.l.bf16 %v1185
  %v1199 = vunpack.c.h.bf16 %v1185
  %v1200 = vunpack.c.l.bf16 %v1186
  %v1202 = vsel %vm48, %v1194, 0
  %v1205 = vsel %vm48, %v1195, 0
  %v1208 = vsel %vm48, %v1196, 0
  %v1211 = vsel %vm48, %v1197, 0
  %v1214 = vsel %vm48, %v1198, 0
  %v1217 = vsel %vm48, %v1199, 0
  %v1220 = vsel %vm48, %v1200, 0
  %1222 = vmatpush.msra.mxu0 0.0
  %1223 = vmatpush.msra.mxu0 0.0
  %1224 = vmatpush.msra.mxu0 0.0
  %1225 = vmatpush.msra.mxu0 0.0
  %1226 = vmatpush.msra.mxu0 0.0
  %1227 = vmatpush.msra.mxu0 0.0
  %1228 = vmatpush.msra.mxu0 0.0
  %1229 = vmatpush.msra.mxu0 0.0
  %1230 = vmatpush.msra.mxu0 0.0
  %1231 = vmatpush.msra.mxu0 0.0
  %1232 = vmatpush.msra.mxu0 0.0
  %1233 = vmatpush.msra.mxu0 0.0
  %1234 = vmatpush.msra.mxu0 0.0
  %1235 = vmatpush.msra.mxu0 0.0
  %1236 = vmatpush.msra.mxu0 %v1202
  %1237 = vmatpush.msra.mxu0 %v1187
  %1238 = vmatmul.f32.gmra.mxu0 %v46
  %v1239 = vpop.f32.mrf.mxu0
  %v1240 = vadd.f32 0.0, %v1239
  %1241 = vdwg.mxu0
  %1242 = vmatpush.msra.mxu0 0.0
  %1243 = vmatpush.msra.mxu0 0.0
  %1244 = vmatpush.msra.mxu0 0.0
  %1245 = vmatpush.msra.mxu0 0.0
  %1246 = vmatpush.msra.mxu0 0.0
  %1247 = vmatpush.msra.mxu0 0.0
  %1248 = vmatpush.msra.mxu0 0.0
  %1249 = vmatpush.msra.mxu0 0.0
  %1250 = vmatpush.msra.mxu0 0.0
  %1251 = vmatpush.msra.mxu0 0.0
  %1252 = vmatpush.msra.mxu0 0.0
  %1253 = vmatpush.msra.mxu0 0.0
  %1254 = vmatpush.msra.mxu0 0.0
  %1255 = vmatpush.msra.mxu0 0.0
  %1256 = vmatpush.msra.mxu0 %v1205
  %1257 = vmatpush.msra.mxu0 %v1188
  %1258 = vmatmul.f32.gmra.mxu0 %v46
  %v1259 = vpop.f32.mrf.mxu0
  %v1260 = vadd.f32 0.0, %v1259
  %1261 = vdwg.mxu0
  %1262 = vmatpush.msra.mxu0 0.0
  %1263 = vmatpush.msra.mxu0 0.0
  %1264 = vmatpush.msra.mxu0 0.0
  %1265 = vmatpush.msra.mxu0 0.0
  %1266 = vmatpush.msra.mxu0 0.0
  %1267 = vmatpush.msra.mxu0 0.0
  %1268 = vmatpush.msra.mxu0 0.0
  %1269 = vmatpush.msra.mxu0 0.0
  %1270 = vmatpush.msra.mxu0 0.0
  %1271 = vmatpush.msra.mxu0 0.0
  %1272 = vmatpush.msra.mxu0 0.0
  %1273 = vmatpush.msra.mxu0 0.0
  %1274 = vmatpush.msra.mxu0 0.0
  %1275 = vmatpush.msra.mxu0 0.0
  %1276 = vmatpush.msra.mxu0 %v1208
  %1277 = vmatpush.msra.mxu0 %v1189
  %1278 = vmatmul.f32.gmra.mxu0 %v46
  %v1279 = vpop.f32.mrf.mxu0
  %v1280 = vadd.f32 0.0, %v1279
  %1281 = vdwg.mxu0
  %1282 = vmatpush.msra.mxu0 0.0
  %1283 = vmatpush.msra.mxu0 0.0
  %1284 = vmatpush.msra.mxu0 0.0
  %1285 = vmatpush.msra.mxu0 0.0
  %1286 = vmatpush.msra.mxu0 0.0
  %1287 = vmatpush.msra.mxu0 0.0
  %1288 = vmatpush.msra.mxu0 0.0
  %1289 = vmatpush.msra.mxu0 0.0
  %1290 = vmatpush.msra.mxu0 0.0
  %1291 = vmatpush.msra.mxu0 0.0
  %1292 = vmatpush.msra.mxu0 0.0
  %1293 = vmatpush.msra.mxu0 0.0
  %1294 = vmatpush.msra.mxu0 0.0
  %1295 = vmatpush.msra.mxu0 0.0
  %1296 = vmatpush.msra.mxu0 %v1211
  %1297 = vmatpush.msra.mxu0 %v1190
  %1298 = vmatmul.f32.gmra.mxu0 %v46
  %v1299 = vpop.f32.mrf.mxu0
  %v1300 = vadd.f32 0.0, %v1299
  %1301 = vdwg.mxu0
  %1302 = vmatpush.msra.mxu0 0.0
  %1303 = vmatpush.msra.mxu0 0.0
  %1304 = vmatpush.msra.mxu0 0.0
  %1305 = vmatpush.msra.mxu0 0.0
  %1306 = vmatpush.msra.mxu0 0.0
  %1307 = vmatpush.msra.mxu0 0.0
  %1308 = vmatpush.msra.mxu0 0.0
  %1309 = vmatpush.msra.mxu0 0.0
  %1310 = vmatpush.msra.mxu0 0.0
  %1311 = vmatpush.msra.mxu0 0.0
  %1312 = vmatpush.msra.mxu0 0.0
  %1313 = vmatpush.msra.mxu0 0.0
  %1314 = vmatpush.msra.mxu0 0.0
  %1315 = vmatpush.msra.mxu0 0.0
  %1316 = vmatpush.msra.mxu0 %v1214
  %1317 = vmatpush.msra.mxu0 %v1191
  %1318 = vmatmul.f32.gmra.mxu0 %v46
  %v1319 = vpop.f32.mrf.mxu0
  %v1320 = vadd.f32 0.0, %v1319
  %1321 = vdwg.mxu0
  %1322 = vmatpush.msra.mxu0 0.0
  %1323 = vmatpush.msra.mxu0 0.0
  %1324 = vmatpush.msra.mxu0 0.0
  %1325 = vmatpush.msra.mxu0 0.0
  %1326 = vmatpush.msra.mxu0 0.0
  %1327 = vmatpush.msra.mxu0 0.0
  %1328 = vmatpush.msra.mxu0 0.0
  %1329 = vmatpush.msra.mxu0 0.0
  %1330 = vmatpush.msra.mxu0 0.0
  %1331 = vmatpush.msra.mxu0 0.0
  %1332 = vmatpush.msra.mxu0 0.0
  %1333 = vmatpush.msra.mxu0 0.0
  %1334 = vmatpush.msra.mxu0 0.0
  %1335 = vmatpush.msra.mxu0 0.0
  %1336 = vmatpush.msra.mxu0 %v1217
  %1337 = vmatpush.msra.mxu0 %v1192
  %1338 = vmatmul.f32.gmra.mxu0 %v46
  %v1339 = vpop.f32.mrf.mxu0
  %v1340 = vadd.f32 0.0, %v1339
  %1341 = vdwg.mxu0
  %1342 = vmatpush.msra.mxu0 0.0
  %1343 = vmatpush.msra.mxu0 0.0
  %1344 = vmatpush.msra.mxu0 0.0
  %1345 = vmatpush.msra.mxu0 0.0
  %1346 = vmatpush.msra.mxu0 0.0
  %1347 = vmatpush.msra.mxu0 0.0
  %1348 = vmatpush.msra.mxu0 0.0
  %1349 = vmatpush.msra.mxu0 0.0
  %1350 = vmatpush.msra.mxu0 0.0
  %1351 = vmatpush.msra.mxu0 0.0
  %1352 = vmatpush.msra.mxu0 0.0
  %1353 = vmatpush.msra.mxu0 0.0
  %1354 = vmatpush.msra.mxu0 0.0
  %1355 = vmatpush.msra.mxu0 0.0
  %1356 = vmatpush.msra.mxu0 %v1220
  %1357 = vmatpush.msra.mxu0 %v1193
  %1358 = vmatmul.f32.gmra.mxu0 %v46
  %v1359 = vpop.f32.mrf.mxu0
  %v1360 = vadd.f32 0.0, %v1359
  %1361 = vdwg.mxu0
  %1365 = vrot.lane.b32.xlu0 %v1260, 60
  %v1366 = vpop.permute.xlu0 %1365
  %1367 = vrot.lane.b32.xlu0 %v1280, 60
  %v1368 = vpop.permute.xlu0 %1367
  %1369 = vrot.lane.b32.xlu0 %v1300, 60
  %v1370 = vpop.permute.xlu0 %1369
  %v1371 = vsel %vm219, %v1366, %v1368
  %v1372 = vsel %vm219, %v1368, %v1370
  %v1375 = vmax.f32 %v1240, %v1371
  %v1376 = vmax.f32 %v1260, %v1372
  %1380 = vrot.lane.b32.xlu0 %v1320, 60
  %v1381 = vpop.permute.xlu0 %1380
  %1382 = vrot.lane.b32.xlu0 %v1340, 60
  %v1383 = vpop.permute.xlu0 %1382
  %1384 = vrot.lane.b32.xlu0 %v1360, 60
  %v1385 = vpop.permute.xlu0 %1384
  %v1386 = vsel %vm219, %v1381, %v1383
  %v1387 = vsel %vm219, %v1383, %v1385
  %v1390 = vmax.f32 %v1300, %v1386
  %v1391 = vmax.f32 %v1320, %v1387
  %1394 = vrot.lane.b32.xlu0 %v1390, 120
  %v1395 = vpop.permute.xlu0 %1394
  %1396 = vrot.lane.b32.xlu0 %v1391, 120
  %v1397 = vpop.permute.xlu0 %1396
  %v1398 = vsel %vm247, %v1395, %v1397
  %v1401 = vmax.f32 %v1375, %v1398
  %v1402 = vmax.f32 %v1376, %v1397
  %v1403 = vadd.f32 %v1401, %v256
  %v1404 = vadd.f32 %v1402, %v256
  %v1405 = vmax.f32 %v1403, 0.0
  %v1406 = vmax.f32 %v1404, 0.0
  %s1407 = scalar_lea.vmem %s0, 336
  %v1408 = vld [vmem:[%s1407] sm:$0xff]
  %v1409 = vld [vmem:[%s1407 + $0x8] sm:$0xff]
  %v1410 = vld [vmem:[%s1407 + $0x10] sm:$0xff]
  %v1411 = vld [vmem:[%s1407 + $0x18] sm:$0xf]
  %v1412 = vld [vmem:[%s1407 + $0x1c] sm:$0x11]
  %v1413 = vld [vmem:[%s1407 + $0x24] sm:$0x11]
  %v1414 = vld [vmem:[%s1407 + $0x2c] sm:$0x11]
  %v1415 = vld [vmem:[%s1407 + $0x34] sm:$0x1]
  %v1416 = vunpack.c.l.bf16 %v1408
  %v1417 = vunpack.c.h.bf16 %v1408
  %v1418 = vunpack.c.l.bf16 %v1409
  %v1419 = vunpack.c.h.bf16 %v1409
  %v1420 = vunpack.c.l.bf16 %v1410
  %v1421 = vunpack.c.h.bf16 %v1410
  %v1422 = vunpack.c.l.bf16 %v1411
  %v1423 = vunpack.c.l.bf16 %v1412
  %v1424 = vunpack.c.h.bf16 %v1412
  %v1425 = vunpack.c.l.bf16 %v1413
  %v1426 = vunpack.c.h.bf16 %v1413
  %v1427 = vunpack.c.l.bf16 %v1414
  %v1428 = vunpack.c.h.bf16 %v1414
  %v1429 = vunpack.c.l.bf16 %v1415
  %v1431 = vsel %vm48, %v1423, 0
  %v1434 = vsel %vm48, %v1424, 0
  %v1437 = vsel %vm48, %v1425, 0
  %v1440 = vsel %vm48, %v1426, 0
  %v1443 = vsel %vm48, %v1427, 0
  %v1446 = vsel %vm48, %v1428, 0
  %v1449 = vsel %vm48, %v1429, 0
  %1451 = vmatpush.msra.mxu0 0.0
  %1452 = vmatpush.msra.mxu0 0.0
  %1453 = vmatpush.msra.mxu0 0.0
  %1454 = vmatpush.msra.mxu0 0.0
  %1455 = vmatpush.msra.mxu0 0.0
  %1456 = vmatpush.msra.mxu0 0.0
  %1457 = vmatpush.msra.mxu0 0.0
  %1458 = vmatpush.msra.mxu0 0.0
  %1459 = vmatpush.msra.mxu0 0.0
  %1460 = vmatpush.msra.mxu0 0.0
  %1461 = vmatpush.msra.mxu0 0.0
  %1462 = vmatpush.msra.mxu0 0.0
  %1463 = vmatpush.msra.mxu0 0.0
  %1464 = vmatpush.msra.mxu0 0.0
  %1465 = vmatpush.msra.mxu0 %v1431
  %1466 = vmatpush.msra.mxu0 %v1416
  %1467 = vmatmul.f32.gmra.mxu0 %v46
  %v1468 = vpop.f32.mrf.mxu0
  %v1469 = vadd.f32 0.0, %v1468
  %1470 = vdwg.mxu0
  %1471 = vmatpush.msra.mxu0 0.0
  %1472 = vmatpush.msra.mxu0 0.0
  %1473 = vmatpush.msra.mxu0 0.0
  %1474 = vmatpush.msra.mxu0 0.0
  %1475 = vmatpush.msra.mxu0 0.0
  %1476 = vmatpush.msra.mxu0 0.0
  %1477 = vmatpush.msra.mxu0 0.0
  %1478 = vmatpush.msra.mxu0 0.0
  %1479 = vmatpush.msra.mxu0 0.0
  %1480 = vmatpush.msra.mxu0 0.0
  %1481 = vmatpush.msra.mxu0 0.0
  %1482 = vmatpush.msra.mxu0 0.0
  %1483 = vmatpush.msra.mxu0 0.0
  %1484 = vmatpush.msra.mxu0 0.0
  %1485 = vmatpush.msra.mxu0 %v1434
  %1486 = vmatpush.msra.mxu0 %v1417
  %1487 = vmatmul.f32.gmra.mxu0 %v46
  %v1488 = vpop.f32.mrf.mxu0
  %v1489 = vadd.f32 0.0, %v1488
  %1490 = vdwg.mxu0
  %1491 = vmatpush.msra.mxu0 0.0
  %1492 = vmatpush.msra.mxu0 0.0
  %1493 = vmatpush.msra.mxu0 0.0
  %1494 = vmatpush.msra.mxu0 0.0
  %1495 = vmatpush.msra.mxu0 0.0
  %1496 = vmatpush.msra.mxu0 0.0
  %1497 = vmatpush.msra.mxu0 0.0
  %1498 = vmatpush.msra.mxu0 0.0
  %1499 = vmatpush.msra.mxu0 0.0
  %1500 = vmatpush.msra.mxu0 0.0
  %1501 = vmatpush.msra.mxu0 0.0
  %1502 = vmatpush.msra.mxu0 0.0
  %1503 = vmatpush.msra.mxu0 0.0
  %1504 = vmatpush.msra.mxu0 0.0
  %1505 = vmatpush.msra.mxu0 %v1437
  %1506 = vmatpush.msra.mxu0 %v1418
  %1507 = vmatmul.f32.gmra.mxu0 %v46
  %v1508 = vpop.f32.mrf.mxu0
  %v1509 = vadd.f32 0.0, %v1508
  %1510 = vdwg.mxu0
  %1511 = vmatpush.msra.mxu0 0.0
  %1512 = vmatpush.msra.mxu0 0.0
  %1513 = vmatpush.msra.mxu0 0.0
  %1514 = vmatpush.msra.mxu0 0.0
  %1515 = vmatpush.msra.mxu0 0.0
  %1516 = vmatpush.msra.mxu0 0.0
  %1517 = vmatpush.msra.mxu0 0.0
  %1518 = vmatpush.msra.mxu0 0.0
  %1519 = vmatpush.msra.mxu0 0.0
  %1520 = vmatpush.msra.mxu0 0.0
  %1521 = vmatpush.msra.mxu0 0.0
  %1522 = vmatpush.msra.mxu0 0.0
  %1523 = vmatpush.msra.mxu0 0.0
  %1524 = vmatpush.msra.mxu0 0.0
  %1525 = vmatpush.msra.mxu0 %v1440
  %1526 = vmatpush.msra.mxu0 %v1419
  %1527 = vmatmul.f32.gmra.mxu0 %v46
  %v1528 = vpop.f32.mrf.mxu0
  %v1529 = vadd.f32 0.0, %v1528
  %1530 = vdwg.mxu0
  %1531 = vmatpush.msra.mxu0 0.0
  %1532 = vmatpush.msra.mxu0 0.0
  %1533 = vmatpush.msra.mxu0 0.0
  %1534 = vmatpush.msra.mxu0 0.0
  %1535 = vmatpush.msra.mxu0 0.0
  %1536 = vmatpush.msra.mxu0 0.0
  %1537 = vmatpush.msra.mxu0 0.0
  %1538 = vmatpush.msra.mxu0 0.0
  %1539 = vmatpush.msra.mxu0 0.0
  %1540 = vmatpush.msra.mxu0 0.0
  %1541 = vmatpush.msra.mxu0 0.0
  %1542 = vmatpush.msra.mxu0 0.0
  %1543 = vmatpush.msra.mxu0 0.0
  %1544 = vmatpush.msra.mxu0 0.0
  %1545 = vmatpush.msra.mxu0 %v1443
  %1546 = vmatpush.msra.mxu0 %v1420
  %1547 = vmatmul.f32.gmra.mxu0 %v46
  %v1548 = vpop.f32.mrf.mxu0
  %v1549 = vadd.f32 0.0, %v1548
  %1550 = vdwg.mxu0
  %1551 = vmatpush.msra.mxu0 0.0
  %1552 = vmatpush.msra.mxu0 0.0
  %1553 = vmatpush.msra.mxu0 0.0
  %1554 = vmatpush.msra.mxu0 0.0
  %1555 = vmatpush.msra.mxu0 0.0
  %1556 = vmatpush.msra.mxu0 0.0
  %1557 = vmatpush.msra.mxu0 0.0
  %1558 = vmatpush.msra.mxu0 0.0
  %1559 = vmatpush.msra.mxu0 0.0
  %1560 = vmatpush.msra.mxu0 0.0
  %1561 = vmatpush.msra.mxu0 0.0
  %1562 = vmatpush.msra.mxu0 0.0
  %1563 = vmatpush.msra.mxu0 0.0
  %1564 = vmatpush.msra.mxu0 0.0
  %1565 = vmatpush.msra.mxu0 %v1446
  %1566 = vmatpush.msra.mxu0 %v1421
  %1567 = vmatmul.f32.gmra.mxu0 %v46
  %v1568 = vpop.f32.mrf.mxu0
  %v1569 = vadd.f32 0.0, %v1568
  %1570 = vdwg.mxu0
  %1571 = vmatpush.msra.mxu0 0.0
  %1572 = vmatpush.msra.mxu0 0.0
  %1573 = vmatpush.msra.mxu0 0.0
  %1574 = vmatpush.msra.mxu0 0.0
  %1575 = vmatpush.msra.mxu0 0.0
  %1576 = vmatpush.msra.mxu0 0.0
  %1577 = vmatpush.msra.mxu0 0.0
  %1578 = vmatpush.msra.mxu0 0.0
  %1579 = vmatpush.msra.mxu0 0.0
  %1580 = vmatpush.msra.mxu0 0.0
  %1581 = vmatpush.msra.mxu0 0.0
  %1582 = vmatpush.msra.mxu0 0.0
  %1583 = vmatpush.msra.mxu0 0.0
  %1584 = vmatpush.msra.mxu0 0.0
  %1585 = vmatpush.msra.mxu0 %v1449
  %1586 = vmatpush.msra.mxu0 %v1422
  %1587 = vmatmul.f32.gmra.mxu0 %v46
  %v1588 = vpop.f32.mrf.mxu0
  %v1589 = vadd.f32 0.0, %v1588
  %1590 = vdwg.mxu0
  %1594 = vrot.lane.b32.xlu0 %v1489, 60
  %v1595 = vpop.permute.xlu0 %1594
  %1596 = vrot.lane.b32.xlu0 %v1509, 60
  %v1597 = vpop.permute.xlu0 %1596
  %1598 = vrot.lane.b32.xlu0 %v1529, 60
  %v1599 = vpop.permute.xlu0 %1598
  %v1600 = vsel %vm219, %v1595, %v1597
  %v1601 = vsel %vm219, %v1597, %v1599
  %v1604 = vmax.f32 %v1469, %v1600
  %v1605 = vmax.f32 %v1489, %v1601
  %1609 = vrot.lane.b32.xlu0 %v1549, 60
  %v1610 = vpop.permute.xlu0 %1609
  %1611 = vrot.lane.b32.xlu0 %v1569, 60
  %v1612 = vpop.permute.xlu0 %1611
  %1613 = vrot.lane.b32.xlu0 %v1589, 60
  %v1614 = vpop.permute.xlu0 %1613
  %v1615 = vsel %vm219, %v1610, %v1612
  %v1616 = vsel %vm219, %v1612, %v1614
  %v1619 = vmax.f32 %v1529, %v1615
  %v1620 = vmax.f32 %v1549, %v1616
  %1623 = vrot.lane.b32.xlu0 %v1619, 120
  %v1624 = vpop.permute.xlu0 %1623
  %1625 = vrot.lane.b32.xlu0 %v1620, 120
  %v1626 = vpop.permute.xlu0 %1625
  %v1627 = vsel %vm247, %v1624, %v1626
  %v1630 = vmax.f32 %v1604, %v1627
  %v1631 = vmax.f32 %v1605, %v1626
  %v1632 = vadd.f32 %v1630, %v256
  %v1633 = vadd.f32 %v1631, %v256
  %v1634 = vmax.f32 %v1632, 0.0
  %v1635 = vmax.f32 %v1633, 0.0
  %s1636 = scalar_lea.vmem %s0, 392
  %v1637 = vld [vmem:[%s1636] sm:$0xff]
  %v1638 = vld [vmem:[%s1636 + $0x8] sm:$0xff]
  %v1639 = vld [vmem:[%s1636 + $0x10] sm:$0xff]
  %v1640 = vld [vmem:[%s1636 + $0x18] sm:$0xf]
  %v1641 = vld [vmem:[%s1636 + $0x1c] sm:$0x11]
  %v1642 = vld [vmem:[%s1636 + $0x24] sm:$0x11]
  %v1643 = vld [vmem:[%s1636 + $0x2c] sm:$0x11]
  %v1644 = vld [vmem:[%s1636 + $0x34] sm:$0x1]
  %v1645 = vunpack.c.l.bf16 %v1637
  %v1646 = vunpack.c.h.bf16 %v1637
  %v1647 = vunpack.c.l.bf16 %v1638
  %v1648 = vunpack.c.h.bf16 %v1638
  %v1649 = vunpack.c.l.bf16 %v1639
  %v1650 = vunpack.c.h.bf16 %v1639
  %v1651 = vunpack.c.l.bf16 %v1640
  %v1652 = vunpack.c.l.bf16 %v1641
  %v1653 = vunpack.c.h.bf16 %v1641
  %v1654 = vunpack.c.l.bf16 %v1642
  %v1655 = vunpack.c.h.bf16 %v1642
  %v1656 = vunpack.c.l.bf16 %v1643
  %v1657 = vunpack.c.h.bf16 %v1643
  %v1658 = vunpack.c.l.bf16 %v1644
  %v1660 = vsel %vm48, %v1652, 0
  %v1663 = vsel %vm48, %v1653, 0
  %v1666 = vsel %vm48, %v1654, 0
  %v1669 = vsel %vm48, %v1655, 0
  %v1672 = vsel %vm48, %v1656, 0
  %v1675 = vsel %vm48, %v1657, 0
  %v1678 = vsel %vm48, %v1658, 0
  %1680 = vmatpush.msra.mxu0 0.0
  %1681 = vmatpush.msra.mxu0 0.0
  %1682 = vmatpush.msra.mxu0 0.0
  %1683 = vmatpush.msra.mxu0 0.0
  %1684 = vmatpush.msra.mxu0 0.0
  %1685 = vmatpush.msra.mxu0 0.0
  %1686 = vmatpush.msra.mxu0 0.0
  %1687 = vmatpush.msra.mxu0 0.0
  %1688 = vmatpush.msra.mxu0 0.0
  %1689 = vmatpush.msra.mxu0 0.0
  %1690 = vmatpush.msra.mxu0 0.0
  %1691 = vmatpush.msra.mxu0 0.0
  %1692 = vmatpush.msra.mxu0 0.0
  %1693 = vmatpush.msra.mxu0 0.0
  %1694 = vmatpush.msra.mxu0 %v1660
  %1695 = vmatpush.msra.mxu0 %v1645
  %1696 = vmatmul.f32.gmra.mxu0 %v46
  %v1697 = vpop.f32.mrf.mxu0
  %v1698 = vadd.f32 0.0, %v1697
  %1699 = vdwg.mxu0
  %1700 = vmatpush.msra.mxu0 0.0
  %1701 = vmatpush.msra.mxu0 0.0
  %1702 = vmatpush.msra.mxu0 0.0
  %1703 = vmatpush.msra.mxu0 0.0
  %1704 = vmatpush.msra.mxu0 0.0
  %1705 = vmatpush.msra.mxu0 0.0
  %1706 = vmatpush.msra.mxu0 0.0
  %1707 = vmatpush.msra.mxu0 0.0
  %1708 = vmatpush.msra.mxu0 0.0
  %1709 = vmatpush.msra.mxu0 0.0
  %1710 = vmatpush.msra.mxu0 0.0
  %1711 = vmatpush.msra.mxu0 0.0
  %1712 = vmatpush.msra.mxu0 0.0
  %1713 = vmatpush.msra.mxu0 0.0
  %1714 = vmatpush.msra.mxu0 %v1663
  %1715 = vmatpush.msra.mxu0 %v1646
  %1716 = vmatmul.f32.gmra.mxu0 %v46
  %v1717 = vpop.f32.mrf.mxu0
  %v1718 = vadd.f32 0.0, %v1717
  %1719 = vdwg.mxu0
  %1720 = vmatpush.msra.mxu0 0.0
  %1721 = vmatpush.msra.mxu0 0.0
  %1722 = vmatpush.msra.mxu0 0.0
  %1723 = vmatpush.msra.mxu0 0.0
  %1724 = vmatpush.msra.mxu0 0.0
  %1725 = vmatpush.msra.mxu0 0.0
  %1726 = vmatpush.msra.mxu0 0.0
  %1727 = vmatpush.msra.mxu0 0.0
  %1728 = vmatpush.msra.mxu0 0.0
  %1729 = vmatpush.msra.mxu0 0.0
  %1730 = vmatpush.msra.mxu0 0.0
  %1731 = vmatpush.msra.mxu0 0.0
  %1732 = vmatpush.msra.mxu0 0.0
  %1733 = vmatpush.msra.mxu0 0.0
  %1734 = vmatpush.msra.mxu0 %v1666
  %1735 = vmatpush.msra.mxu0 %v1647
  %1736 = vmatmul.f32.gmra.mxu0 %v46
  %v1737 = vpop.f32.mrf.mxu0
  %v1738 = vadd.f32 0.0, %v1737
  %1739 = vdwg.mxu0
  %1740 = vmatpush.msra.mxu0 0.0
  %1741 = vmatpush.msra.mxu0 0.0
  %1742 = vmatpush.msra.mxu0 0.0
  %1743 = vmatpush.msra.mxu0 0.0
  %1744 = vmatpush.msra.mxu0 0.0
  %1745 = vmatpush.msra.mxu0 0.0
  %1746 = vmatpush.msra.mxu0 0.0
  %1747 = vmatpush.msra.mxu0 0.0
  %1748 = vmatpush.msra.mxu0 0.0
  %1749 = vmatpush.msra.mxu0 0.0
  %1750 = vmatpush.msra.mxu0 0.0
  %1751 = vmatpush.msra.mxu0 0.0
  %1752 = vmatpush.msra.mxu0 0.0
  %1753 = vmatpush.msra.mxu0 0.0
  %1754 = vmatpush.msra.mxu0 %v1669
  %1755 = vmatpush.msra.mxu0 %v1648
  %1756 = vmatmul.f32.gmra.mxu0 %v46
  %v1757 = vpop.f32.mrf.mxu0
  %v1758 = vadd.f32 0.0, %v1757
  %1759 = vdwg.mxu0
  %1760 = vmatpush.msra.mxu0 0.0
  %1761 = vmatpush.msra.mxu0 0.0
  %1762 = vmatpush.msra.mxu0 0.0
  %1763 = vmatpush.msra.mxu0 0.0
  %1764 = vmatpush.msra.mxu0 0.0
  %1765 = vmatpush.msra.mxu0 0.0
  %1766 = vmatpush.msra.mxu0 0.0
  %1767 = vmatpush.msra.mxu0 0.0
  %1768 = vmatpush.msra.mxu0 0.0
  %1769 = vmatpush.msra.mxu0 0.0
  %1770 = vmatpush.msra.mxu0 0.0
  %1771 = vmatpush.msra.mxu0 0.0
  %1772 = vmatpush.msra.mxu0 0.0
  %1773 = vmatpush.msra.mxu0 0.0
  %1774 = vmatpush.msra.mxu0 %v1672
  %1775 = vmatpush.msra.mxu0 %v1649
  %1776 = vmatmul.f32.gmra.mxu0 %v46
  %v1777 = vpop.f32.mrf.mxu0
  %v1778 = vadd.f32 0.0, %v1777
  %1779 = vdwg.mxu0
  %1780 = vmatpush.msra.mxu0 0.0
  %1781 = vmatpush.msra.mxu0 0.0
  %1782 = vmatpush.msra.mxu0 0.0
  %1783 = vmatpush.msra.mxu0 0.0
  %1784 = vmatpush.msra.mxu0 0.0
  %1785 = vmatpush.msra.mxu0 0.0
  %1786 = vmatpush.msra.mxu0 0.0
  %1787 = vmatpush.msra.mxu0 0.0
  %1788 = vmatpush.msra.mxu0 0.0
  %1789 = vmatpush.msra.mxu0 0.0
  %1790 = vmatpush.msra.mxu0 0.0
  %1791 = vmatpush.msra.mxu0 0.0
  %1792 = vmatpush.msra.mxu0 0.0
  %1793 = vmatpush.msra.mxu0 0.0
  %1794 = vmatpush.msra.mxu0 %v1675
  %1795 = vmatpush.msra.mxu0 %v1650
  %1796 = vmatmul.f32.gmra.mxu0 %v46
  %v1797 = vpop.f32.mrf.mxu0
  %v1798 = vadd.f32 0.0, %v1797
  %1799 = vdwg.mxu0
  %1800 = vmatpush.msra.mxu0 0.0
  %1801 = vmatpush.msra.mxu0 0.0
  %1802 = vmatpush.msra.mxu0 0.0
  %1803 = vmatpush.msra.mxu0 0.0
  %1804 = vmatpush.msra.mxu0 0.0
  %1805 = vmatpush.msra.mxu0 0.0
  %1806 = vmatpush.msra.mxu0 0.0
  %1807 = vmatpush.msra.mxu0 0.0
  %1808 = vmatpush.msra.mxu0 0.0
  %1809 = vmatpush.msra.mxu0 0.0
  %1810 = vmatpush.msra.mxu0 0.0
  %1811 = vmatpush.msra.mxu0 0.0
  %1812 = vmatpush.msra.mxu0 0.0
  %1813 = vmatpush.msra.mxu0 0.0
  %1814 = vmatpush.msra.mxu0 %v1678
  %1815 = vmatpush.msra.mxu0 %v1651
  %1816 = vmatmul.f32.gmra.mxu0 %v46
  %v1817 = vpop.f32.mrf.mxu0
  %v1818 = vadd.f32 0.0, %v1817
  %1819 = vdwg.mxu0
  %1823 = vrot.lane.b32.xlu0 %v1718, 60
  %v1824 = vpop.permute.xlu0 %1823
  %1825 = vrot.lane.b32.xlu0 %v1738, 60
  %v1826 = vpop.permute.xlu0 %1825
  %1827 = vrot.lane.b32.xlu0 %v1758, 60
  %v1828 = vpop.permute.xlu0 %1827
  %v1829 = vsel %vm219, %v1824, %v1826
  %v1830 = vsel %vm219, %v1826, %v1828
  %v1833 = vmax.f32 %v1698, %v1829
  %v1834 = vmax.f32 %v1718, %v1830
  %1838 = vrot.lane.b32.xlu0 %v1778, 60
  %v1839 = vpop.permute.xlu0 %1838
  %1840 = vrot.lane.b32.xlu0 %v1798, 60
  %v1841 = vpop.permute.xlu0 %1840
  %1842 = vrot.lane.b32.xlu0 %v1818, 60
  %v1843 = vpop.permute.xlu0 %1842
  %v1844 = vsel %vm219, %v1839, %v1841
  %v1845 = vsel %vm219, %v1841, %v1843
  %v1848 = vmax.f32 %v1758, %v1844
  %v1849 = vmax.f32 %v1778, %v1845
  %1852 = vrot.lane.b32.xlu0 %v1848, 120
  %v1853 = vpop.permute.xlu0 %1852
  %1854 = vrot.lane.b32.xlu0 %v1849, 120
  %v1855 = vpop.permute.xlu0 %1854
  %v1856 = vsel %vm247, %v1853, %v1855
  %v1859 = vmax.f32 %v1833, %v1856
  %v1860 = vmax.f32 %v1834, %v1855
  %v1861 = vadd.f32 %v1859, %v256
  %v1862 = vadd.f32 %v1860, %v256
  %v1863 = vmax.f32 %v1861, 0.0
  %v1864 = vmax.f32 %v1862, 0.0
  %v1867 = vrot.slane %v489, 7
  %v1868 = vrot.slane %v490, 7
  %v1873 = vrot.slane %v718, 6
  %v1874 = vrot.slane %v719, 6
  %v1879 = vrot.slane %v947, 5
  %v1880 = vrot.slane %v948, 5
  %v1885 = vrot.slane %v1176, 4
  %v1886 = vrot.slane %v1177, 4
  %v1891 = vrot.slane %v1405, 3
  %v1892 = vrot.slane %v1406, 3
  %v1897 = vrot.slane %v1634, 2
  %v1898 = vrot.slane %v1635, 2
  %v1903 = vrot.slane %v1863, 1
  %v1904 = vrot.slane %v1864, 1
  %v1907 = vsel %vm48, %v260, %v1867
  %v1908 = vsel %vm48, %v261, %v1868
  %vm1909 = vcmask 1041408
  %v1910 = vsel %vm1909, %v1907, %v1873
  %v1911 = vsel %vm1909, %v1908, %v1874
  %vm1912 = vcmask 1042432
  %v1913 = vsel %vm1912, %v1910, %v1879
  %v1914 = vsel %vm1912, %v1911, %v1880
  %vm1915 = vcmask 1043456
  %v1916 = vsel %vm1915, %v1913, %v1885
  %v1917 = vsel %vm1915, %v1914, %v1886
  %vm1918 = vcmask 1044480
  %v1919 = vsel %vm1918, %v1916, %v1891
  %v1920 = vsel %vm1918, %v1917, %v1892
  %vm1921 = vcmask 1045504
  %v1922 = vsel %vm1921, %v1919, %v1897
  %v1923 = vsel %vm1921, %v1920, %v1898
  %vm1924 = vcmask 1046528
  %v1925 = vsel %vm1924, %v1922, %v1903
  %v1926 = vsel %vm1924, %v1923, %v1904
  %v1927 = vld [vmem:[%s3] sm:$0xff]
  %v1928 = vld [vmem:[%s3 + $0x8] sm:$0xff]
  %v1929 = vld [vmem:[%s3 + $0x10] sm:$0xff]
  %v1930 = vld [vmem:[%s3 + $0x18] sm:$0xff]
  %v1931 = vld [vmem:[%s3 + $0x20] sm:$0xff]
  %v1932 = vld [vmem:[%s3 + $0x28] sm:$0xff]
  %v1933 = vld [vmem:[%s3 + $0x30] sm:$0xff]
  %v1934 = vld [vmem:[%s3 + $0x38] sm:$0xff]
  %v1935 = vld [vmem:[%s3 + $0x40] sm:$0xff]
  %v1936 = vld [vmem:[%s3 + $0x48] sm:$0xff]
  %v1937 = vld [vmem:[%s3 + $0x50] sm:$0xff]
  %v1938 = vld [vmem:[%s3 + $0x58] sm:$0xff]
  %v1939 = vld [vmem:[%s3 + $0x60] sm:$0xff]
  %v1940 = vld [vmem:[%s3 + $0x68] sm:$0xff]
  %v1941 = vld [vmem:[%s3 + $0x70] sm:$0xff]
  %v1942 = vld [vmem:[%s3 + $0x78] sm:$0xff]
  %v1943 = vld [vmem:[%s3 + $0x80] sm:$0xff]
  %v1944 = vld [vmem:[%s3 + $0x88] sm:$0xff]
  %v1945 = vld [vmem:[%s3 + $0x90] sm:$0xff]
  %v1946 = vld [vmem:[%s3 + $0x98] sm:$0xff]
  %v1947 = vld [vmem:[%s3 + $0xa0] sm:$0xff]
  %v1948 = vld [vmem:[%s3 + $0xa8] sm:$0xff]
  %v1949 = vld [vmem:[%s3 + $0xb0] sm:$0xff]
  %v1950 = vld [vmem:[%s3 + $0xb8] sm:$0xff]
  %v1951 = vld [vmem:[%s3 + $0xc0] sm:$0xf]
  %v1954 = vrot.slane %v260, 1
  %v1955 = vrot.slane %v261, 1
  %v1958 = vrot.slane %v718, 7
  %v1959 = vrot.slane %v719, 7
  %v1962 = vrot.slane %v947, 6
  %v1963 = vrot.slane %v948, 6
  %v1966 = vrot.slane %v1176, 5
  %v1967 = vrot.slane %v1177, 5
  %v1970 = vrot.slane %v1405, 4
  %v1971 = vrot.slane %v1406, 4
  %v1974 = vrot.slane %v1634, 3
  %v1975 = vrot.slane %v1635, 3
  %v1978 = vrot.slane %v1863, 2
  %v1979 = vrot.slane %v1864, 2
  %v1982 = vsel %vm48, %v1954, %v489
  %v1983 = vsel %vm48, %v1955, %v490
  %v1984 = vsel %vm1909, %v1982, %v1958
  %v1985 = vsel %vm1909, %v1983, %v1959
  %v1986 = vsel %vm1912, %v1984, %v1962
  %v1987 = vsel %vm1912, %v1985, %v1963
  %v1988 = vsel %vm1915, %v1986, %v1966
  %v1989 = vsel %vm1915, %v1987, %v1967
  %v1990 = vsel %vm1918, %v1988, %v1970
  %v1991 = vsel %vm1918, %v1989, %v1971
  %v1992 = vsel %vm1921, %v1990, %v1974
  %v1993 = vsel %vm1921, %v1991, %v1975
  %v1994 = vsel %vm1924, %v1992, %v1978
  %v1995 = vsel %vm1924, %v1993, %v1979
  %s1996 = scalar_lea.vmem %s3, 200
  %v1997 = vld [vmem:[%s1996] sm:$0xff]
  %v1998 = vld [vmem:[%s1996 + $0x8] sm:$0xff]
  %v1999 = vld [vmem:[%s1996 + $0x10] sm:$0xff]
  %v2000 = vld [vmem:[%s1996 + $0x18] sm:$0xff]
  %v2001 = vld [vmem:[%s1996 + $0x20] sm:$0xff]
  %v2002 = vld [vmem:[%s1996 + $0x28] sm:$0xff]
  %v2003 = vld [vmem:[%s1996 + $0x30] sm:$0xff]
  %v2004 = vld [vmem:[%s1996 + $0x38] sm:$0xff]
  %v2005 = vld [vmem:[%s1996 + $0x40] sm:$0xff]
  %v2006 = vld [vmem:[%s1996 + $0x48] sm:$0xff]
  %v2007 = vld [vmem:[%s1996 + $0x50] sm:$0xff]
  %v2008 = vld [vmem:[%s1996 + $0x58] sm:$0xff]
  %v2009 = vld [vmem:[%s1996 + $0x60] sm:$0xff]
  %v2010 = vld [vmem:[%s1996 + $0x68] sm:$0xff]
  %v2011 = vld [vmem:[%s1996 + $0x70] sm:$0xff]
  %v2012 = vld [vmem:[%s1996 + $0x78] sm:$0xff]
  %v2013 = vld [vmem:[%s1996 + $0x80] sm:$0xff]
  %v2014 = vld [vmem:[%s1996 + $0x88] sm:$0xff]
  %v2015 = vld [vmem:[%s1996 + $0x90] sm:$0xff]
  %v2016 = vld [vmem:[%s1996 + $0x98] sm:$0xff]
  %v2017 = vld [vmem:[%s1996 + $0xa0] sm:$0xff]
  %v2018 = vld [vmem:[%s1996 + $0xa8] sm:$0xff]
  %v2019 = vld [vmem:[%s1996 + $0xb0] sm:$0xff]
  %v2020 = vld [vmem:[%s1996 + $0xb8] sm:$0xff]
  %v2021 = vld [vmem:[%s1996 + $0xc0] sm:$0xf]
  %vm2022 = vcmask 556032
  %v2024 = vsel %vm2022, %v1995, 0
  %v2027 = vsel %vm1915, %v2021, 0
  %2029 = vmatpush.msra.mxu0 %v2012
  %2030 = vmatpush.msra.mxu0 %v2011
  %2031 = vmatpush.msra.mxu0 %v2010
  %2032 = vmatpush.msra.mxu0 %v2009
  %2033 = vmatpush.msra.mxu0 %v2008
  %2034 = vmatpush.msra.mxu0 %v2007
  %2035 = vmatpush.msra.mxu0 %v2006
  %2036 = vmatpush.msra.mxu0 %v2005
  %2037 = vmatpush.msra.mxu0 %v2004
  %2038 = vmatpush.msra.mxu0 %v2003
  %2039 = vmatpush.msra.mxu0 %v2002
  %2040 = vmatpush.msra.mxu0 %v2001
  %2041 = vmatpush.msra.mxu0 %v2000
  %2042 = vmatpush.msra.mxu0 %v1999
  %2043 = vmatpush.msra.mxu0 %v1998
  %2044 = vmatpush.msra.mxu0 %v1997
  %2045 = vmatmul.f32.gmra.mxu0 %v1994
  %v2046 = vpop.f32.mrf.mxu0
  %v2047 = vadd.f32 0.0, %v2046
  %2048 = vdwg.mxu0
  %2049 = vmatpush.msra.mxu0 0.0
  %2050 = vmatpush.msra.mxu0 0.0
  %2051 = vmatpush.msra.mxu0 0.0
  %2052 = vmatpush.msra.mxu0 0.0
  %2053 = vmatpush.msra.mxu0 0.0
  %2054 = vmatpush.msra.mxu0 0.0
  %2055 = vmatpush.msra.mxu0 0.0
  %2056 = vmatpush.msra.mxu0 %v2027
  %2057 = vmatpush.msra.mxu0 %v2020
  %2058 = vmatpush.msra.mxu0 %v2019
  %2059 = vmatpush.msra.mxu0 %v2018
  %2060 = vmatpush.msra.mxu0 %v2017
  %2061 = vmatpush.msra.mxu0 %v2016
  %2062 = vmatpush.msra.mxu0 %v2015
  %2063 = vmatpush.msra.mxu0 %v2014
  %2064 = vmatpush.msra.mxu0 %v2013
  %2065 = vmatmul.f32.gmra.mxu0 %v2024
  %v2066 = vpop.f32.mrf.mxu0
  %v2067 = vadd.f32 %v2047, %v2066
  %2068 = vdwg.mxu0
  %v2070 = vsel %vm2022, %v1926, 0
  %v2073 = vsel %vm1915, %v1951, 0
  %2075 = vmatpush.msra.mxu0 %v1942
  %2076 = vmatpush.msra.mxu0 %v1941
  %2077 = vmatpush.msra.mxu0 %v1940
  %2078 = vmatpush.msra.mxu0 %v1939
  %2079 = vmatpush.msra.mxu0 %v1938
  %2080 = vmatpush.msra.mxu0 %v1937
  %2081 = vmatpush.msra.mxu0 %v1936
  %2082 = vmatpush.msra.mxu0 %v1935
  %2083 = vmatpush.msra.mxu0 %v1934
  %2084 = vmatpush.msra.mxu0 %v1933
  %2085 = vmatpush.msra.mxu0 %v1932
  %2086 = vmatpush.msra.mxu0 %v1931
  %2087 = vmatpush.msra.mxu0 %v1930
  %2088 = vmatpush.msra.mxu0 %v1929
  %2089 = vmatpush.msra.mxu0 %v1928
  %2090 = vmatpush.msra.mxu0 %v1927
  %2091 = vmatmul.f32.gmra.mxu0 %v1925
  %v2092 = vpop.f32.mrf.mxu0
  %v2093 = vadd.f32 %v2067, %v2092
  %2094 = vdwg.mxu0
  %2095 = vmatpush.msra.mxu0 0.0
  %2096 = vmatpush.msra.mxu0 0.0
  %2097 = vmatpush.msra.mxu0 0.0
  %2098 = vmatpush.msra.mxu0 0.0
  %2099 = vmatpush.msra.mxu0 0.0
  %2100 = vmatpush.msra.mxu0 0.0
  %2101 = vmatpush.msra.mxu0 0.0
  %2102 = vmatpush.msra.mxu0 %v2073
  %2103 = vmatpush.msra.mxu0 %v1950
  %2104 = vmatpush.msra.mxu0 %v1949
  %2105 = vmatpush.msra.mxu0 %v1948
  %2106 = vmatpush.msra.mxu0 %v1947
  %2107 = vmatpush.msra.mxu0 %v1946
  %2108 = vmatpush.msra.mxu0 %v1945
  %2109 = vmatpush.msra.mxu0 %v1944
  %2110 = vmatpush.msra.mxu0 %v1943
  %2111 = vmatmul.f32.gmra.mxu0 %v2070
  %v2112 = vpop.f32.mrf.mxu0
  %v2113 = vadd.f32 %v2093, %v2112
  %2114 = vdwg.mxu0
  %v2115 = vrot.slane %v260, 2
  %v2116 = vrot.slane %v261, 2
  %v2119 = vrot.slane %v489, 1
  %v2120 = vrot.slane %v490, 1
  %v2123 = vrot.slane %v947, 7
  %v2124 = vrot.slane %v948, 7
  %v2127 = vrot.slane %v1176, 6
  %v2128 = vrot.slane %v1177, 6
  %v2131 = vrot.slane %v1405, 5
  %v2132 = vrot.slane %v1406, 5
  %v2135 = vrot.slane %v1634, 4
  %v2136 = vrot.slane %v1635, 4
  %v2139 = vrot.slane %v1863, 3
  %v2140 = vrot.slane %v1864, 3
  %v2143 = vsel %vm48, %v2115, %v2119
  %v2144 = vsel %vm48, %v2116, %v2120
  %v2145 = vsel %vm1909, %v2143, %v718
  %v2146 = vsel %vm1909, %v2144, %v719
  %v2147 = vsel %vm1912, %v2145, %v2123
  %v2148 = vsel %vm1912, %v2146, %v2124
  %v2149 = vsel %vm1915, %v2147, %v2127
  %v2150 = vsel %vm1915, %v2148, %v2128
  %v2151 = vsel %vm1918, %v2149, %v2131
  %v2152 = vsel %vm1918, %v2150, %v2132
  %v2153 = vsel %vm1921, %v2151, %v2135
  %v2154 = vsel %vm1921, %v2152, %v2136
  %v2155 = vsel %vm1924, %v2153, %v2139
  %v2156 = vsel %vm1924, %v2154, %v2140
  %s2157 = scalar_lea.vmem %s3, 400
  %v2158 = vld [vmem:[%s2157] sm:$0xff]
  %v2159 = vld [vmem:[%s2157 + $0x8] sm:$0xff]
  %v2160 = vld [vmem:[%s2157 + $0x10] sm:$0xff]
  %v2161 = vld [vmem:[%s2157 + $0x18] sm:$0xff]
  %v2162 = vld [vmem:[%s2157 + $0x20] sm:$0xff]
  %v2163 = vld [vmem:[%s2157 + $0x28] sm:$0xff]
  %v2164 = vld [vmem:[%s2157 + $0x30] sm:$0xff]
  %v2165 = vld [vmem:[%s2157 + $0x38] sm:$0xff]
  %v2166 = vld [vmem:[%s2157 + $0x40] sm:$0xff]
  %v2167 = vld [vmem:[%s2157 + $0x48] sm:$0xff]
  %v2168 = vld [vmem:[%s2157 + $0x50] sm:$0xff]
  %v2169 = vld [vmem:[%s2157 + $0x58] sm:$0xff]
  %v2170 = vld [vmem:[%s2157 + $0x60] sm:$0xff]
  %v2171 = vld [vmem:[%s2157 + $0x68] sm:$0xff]
  %v2172 = vld [vmem:[%s2157 + $0x70] sm:$0xff]
  %v2173 = vld [vmem:[%s2157 + $0x78] sm:$0xff]
  %v2174 = vld [vmem:[%s2157 + $0x80] sm:$0xff]
  %v2175 = vld [vmem:[%s2157 + $0x88] sm:$0xff]
  %v2176 = vld [vmem:[%s2157 + $0x90] sm:$0xff]
  %v2177 = vld [vmem:[%s2157 + $0x98] sm:$0xff]
  %v2178 = vld [vmem:[%s2157 + $0xa0] sm:$0xff]
  %v2179 = vld [vmem:[%s2157 + $0xa8] sm:$0xff]
  %v2180 = vld [vmem:[%s2157 + $0xb0] sm:$0xff]
  %v2181 = vld [vmem:[%s2157 + $0xb8] sm:$0xff]
  %v2182 = vld [vmem:[%s2157 + $0xc0] sm:$0xf]
  %v2184 = vsel %vm2022, %v2156, 0
  %v2187 = vsel %vm1915, %v2182, 0
  %2189 = vmatpush.msra.mxu0 %v2173
  %2190 = vmatpush.msra.mxu0 %v2172
  %2191 = vmatpush.msra.mxu0 %v2171
  %2192 = vmatpush.msra.mxu0 %v2170
  %2193 = vmatpush.msra.mxu0 %v2169
  %2194 = vmatpush.msra.mxu0 %v2168
  %2195 = vmatpush.msra.mxu0 %v2167
  %2196 = vmatpush.msra.mxu0 %v2166
  %2197 = vmatpush.msra.mxu0 %v2165
  %2198 = vmatpush.msra.mxu0 %v2164
  %2199 = vmatpush.msra.mxu0 %v2163
  %2200 = vmatpush.msra.mxu0 %v2162
  %2201 = vmatpush.msra.mxu0 %v2161
  %2202 = vmatpush.msra.mxu0 %v2160
  %2203 = vmatpush.msra.mxu0 %v2159
  %2204 = vmatpush.msra.mxu0 %v2158
  %2205 = vmatmul.f32.gmra.mxu0 %v2155
  %v2206 = vpop.f32.mrf.mxu0
  %v2207 = vadd.f32 0.0, %v2206
  %2208 = vdwg.mxu0
  %2209 = vmatpush.msra.mxu0 0.0
  %2210 = vmatpush.msra.mxu0 0.0
  %2211 = vmatpush.msra.mxu0 0.0
  %2212 = vmatpush.msra.mxu0 0.0
  %2213 = vmatpush.msra.mxu0 0.0
  %2214 = vmatpush.msra.mxu0 0.0
  %2215 = vmatpush.msra.mxu0 0.0
  %2216 = vmatpush.msra.mxu0 %v2187
  %2217 = vmatpush.msra.mxu0 %v2181
  %2218 = vmatpush.msra.mxu0 %v2180
  %2219 = vmatpush.msra.mxu0 %v2179
  %2220 = vmatpush.msra.mxu0 %v2178
  %2221 = vmatpush.msra.mxu0 %v2177
  %2222 = vmatpush.msra.mxu0 %v2176
  %2223 = vmatpush.msra.mxu0 %v2175
  %2224 = vmatpush.msra.mxu0 %v2174
  %2225 = vmatmul.f32.gmra.mxu0 %v2184
  %v2226 = vpop.f32.mrf.mxu0
  %v2227 = vadd.f32 %v2207, %v2226
  %2228 = vdwg.mxu0
  %v2229 = vadd.f32 %v2113, %v2227
  %v2230 = vrot.slane %v260, 3
  %v2231 = vrot.slane %v261, 3
  %v2234 = vrot.slane %v489, 2
  %v2235 = vrot.slane %v490, 2
  %v2238 = vrot.slane %v718, 1
  %v2239 = vrot.slane %v719, 1
  %v2242 = vrot.slane %v1176, 7
  %v2243 = vrot.slane %v1177, 7
  %v2246 = vrot.slane %v1405, 6
  %v2247 = vrot.slane %v1406, 6
  %v2250 = vrot.slane %v1634, 5
  %v2251 = vrot.slane %v1635, 5
  %v2254 = vrot.slane %v1863, 4
  %v2255 = vrot.slane %v1864, 4
  %v2258 = vsel %vm48, %v2230, %v2234
  %v2259 = vsel %vm48, %v2231, %v2235
  %v2260 = vsel %vm1909, %v2258, %v2238
  %v2261 = vsel %vm1909, %v2259, %v2239
  %v2262 = vsel %vm1912, %v2260, %v947
  %v2263 = vsel %vm1912, %v2261, %v948
  %v2264 = vsel %vm1915, %v2262, %v2242
  %v2265 = vsel %vm1915, %v2263, %v2243
  %v2266 = vsel %vm1918, %v2264, %v2246
  %v2267 = vsel %vm1918, %v2265, %v2247
  %v2268 = vsel %vm1921, %v2266, %v2250
  %v2269 = vsel %vm1921, %v2267, %v2251
  %v2270 = vsel %vm1924, %v2268, %v2254
  %v2271 = vsel %vm1924, %v2269, %v2255
  %s2272 = scalar_lea.vmem %s3, 600
  %v2273 = vld [vmem:[%s2272] sm:$0xff]
  %v2274 = vld [vmem:[%s2272 + $0x8] sm:$0xff]
  %v2275 = vld [vmem:[%s2272 + $0x10] sm:$0xff]
  %v2276 = vld [vmem:[%s2272 + $0x18] sm:$0xff]
  %v2277 = vld [vmem:[%s2272 + $0x20] sm:$0xff]
  %v2278 = vld [vmem:[%s2272 + $0x28] sm:$0xff]
  %v2279 = vld [vmem:[%s2272 + $0x30] sm:$0xff]
  %v2280 = vld [vmem:[%s2272 + $0x38] sm:$0xff]
  %v2281 = vld [vmem:[%s2272 + $0x40] sm:$0xff]
  %v2282 = vld [vmem:[%s2272 + $0x48] sm:$0xff]
  %v2283 = vld [vmem:[%s2272 + $0x50] sm:$0xff]
  %v2284 = vld [vmem:[%s2272 + $0x58] sm:$0xff]
  %v2285 = vld [vmem:[%s2272 + $0x60] sm:$0xff]
  %v2286 = vld [vmem:[%s2272 + $0x68] sm:$0xff]
  %v2287 = vld [vmem:[%s2272 + $0x70] sm:$0xff]
  %v2288 = vld [vmem:[%s2272 + $0x78] sm:$0xff]
  %v2289 = vld [vmem:[%s2272 + $0x80] sm:$0xff]
  %v2290 = vld [vmem:[%s2272 + $0x88] sm:$0xff]
  %v2291 = vld [vmem:[%s2272 + $0x90] sm:$0xff]
  %v2292 = vld [vmem:[%s2272 + $0x98] sm:$0xff]
  %v2293 = vld [vmem:[%s2272 + $0xa0] sm:$0xff]
  %v2294 = vld [vmem:[%s2272 + $0xa8] sm:$0xff]
  %v2295 = vld [vmem:[%s2272 + $0xb0] sm:$0xff]
  %v2296 = vld [vmem:[%s2272 + $0xb8] sm:$0xff]
  %v2297 = vld [vmem:[%s2272 + $0xc0] sm:$0xf]
  %v2299 = vsel %vm2022, %v2271, 0
  %v2302 = vsel %vm1915, %v2297, 0
  %2304 = vmatpush.msra.mxu0 %v2288
  %2305 = vmatpush.msra.mxu0 %v2287
  %2306 = vmatpush.msra.mxu0 %v2286
  %2307 = vmatpush.msra.mxu0 %v2285
  %2308 = vmatpush.msra.mxu0 %v2284
  %2309 = vmatpush.msra.mxu0 %v2283
  %2310 = vmatpush.msra.mxu0 %v2282
  %2311 = vmatpush.msra.mxu0 %v2281
  %2312 = vmatpush.msra.mxu0 %v2280
  %2313 = vmatpush.msra.mxu0 %v2279
  %2314 = vmatpush.msra.mxu0 %v2278
  %2315 = vmatpush.msra.mxu0 %v2277
  %2316 = vmatpush.msra.mxu0 %v2276
  %2317 = vmatpush.msra.mxu0 %v2275
  %2318 = vmatpush.msra.mxu0 %v2274
  %2319 = vmatpush.msra.mxu0 %v2273
  %2320 = vmatmul.f32.gmra.mxu0 %v2270
  %v2321 = vpop.f32.mrf.mxu0
  %v2322 = vadd.f32 0.0, %v2321
  %2323 = vdwg.mxu0
  %2324 = vmatpush.msra.mxu0 0.0
  %2325 = vmatpush.msra.mxu0 0.0
  %2326 = vmatpush.msra.mxu0 0.0
  %2327 = vmatpush.msra.mxu0 0.0
  %2328 = vmatpush.msra.mxu0 0.0
  %2329 = vmatpush.msra.mxu0 0.0
  %2330 = vmatpush.msra.mxu0 0.0
  %2331 = vmatpush.msra.mxu0 %v2302
  %2332 = vmatpush.msra.mxu0 %v2296
  %2333 = vmatpush.msra.mxu0 %v2295
  %2334 = vmatpush.msra.mxu0 %v2294
  %2335 = vmatpush.msra.mxu0 %v2293
  %2336 = vmatpush.msra.mxu0 %v2292
  %2337 = vmatpush.msra.mxu0 %v2291
  %2338 = vmatpush.msra.mxu0 %v2290
  %2339 = vmatpush.msra.mxu0 %v2289
  %2340 = vmatmul.f32.gmra.mxu0 %v2299
  %v2341 = vpop.f32.mrf.mxu0
  %v2342 = vadd.f32 %v2322, %v2341
  %2343 = vdwg.mxu0
  %v2344 = vadd.f32 %v2229, %v2342
  %v2345 = vrot.slane %v260, 4
  %v2346 = vrot.slane %v261, 4
  %v2349 = vrot.slane %v489, 3
  %v2350 = vrot.slane %v490, 3
  %v2353 = vrot.slane %v718, 2
  %v2354 = vrot.slane %v719, 2
  %v2357 = vrot.slane %v947, 1
  %v2358 = vrot.slane %v948, 1
  %v2361 = vrot.slane %v1405, 7
  %v2362 = vrot.slane %v1406, 7
  %v2365 = vrot.slane %v1634, 6
  %v2366 = vrot.slane %v1635, 6
  %v2369 = vrot.slane %v1863, 5
  %v2370 = vrot.slane %v1864, 5
  %v2373 = vsel %vm48, %v2345, %v2349
  %v2374 = vsel %vm48, %v2346, %v2350
  %v2375 = vsel %vm1909, %v2373, %v2353
  %v2376 = vsel %vm1909, %v2374, %v2354
  %v2377 = vsel %vm1912, %v2375, %v2357
  %v2378 = vsel %vm1912, %v2376, %v2358
  %v2379 = vsel %vm1915, %v2377, %v1176
  %v2380 = vsel %vm1915, %v2378, %v1177
  %v2381 = vsel %vm1918, %v2379, %v2361
  %v2382 = vsel %vm1918, %v2380, %v2362
  %v2383 = vsel %vm1921, %v2381, %v2365
  %v2384 = vsel %vm1921, %v2382, %v2366
  %v2385 = vsel %vm1924, %v2383, %v2369
  %v2386 = vsel %vm1924, %v2384, %v2370
  %s2387 = scalar_lea.vmem %s3, 800
  %v2388 = vld [vmem:[%s2387] sm:$0xff]
  %v2389 = vld [vmem:[%s2387 + $0x8] sm:$0xff]
  %v2390 = vld [vmem:[%s2387 + $0x10] sm:$0xff]
  %v2391 = vld [vmem:[%s2387 + $0x18] sm:$0xff]
  %v2392 = vld [vmem:[%s2387 + $0x20] sm:$0xff]
  %v2393 = vld [vmem:[%s2387 + $0x28] sm:$0xff]
  %v2394 = vld [vmem:[%s2387 + $0x30] sm:$0xff]
  %v2395 = vld [vmem:[%s2387 + $0x38] sm:$0xff]
  %v2396 = vld [vmem:[%s2387 + $0x40] sm:$0xff]
  %v2397 = vld [vmem:[%s2387 + $0x48] sm:$0xff]
  %v2398 = vld [vmem:[%s2387 + $0x50] sm:$0xff]
  %v2399 = vld [vmem:[%s2387 + $0x58] sm:$0xff]
  %v2400 = vld [vmem:[%s2387 + $0x60] sm:$0xff]
  %v2401 = vld [vmem:[%s2387 + $0x68] sm:$0xff]
  %v2402 = vld [vmem:[%s2387 + $0x70] sm:$0xff]
  %v2403 = vld [vmem:[%s2387 + $0x78] sm:$0xff]
  %v2404 = vld [vmem:[%s2387 + $0x80] sm:$0xff]
  %v2405 = vld [vmem:[%s2387 + $0x88] sm:$0xff]
  %v2406 = vld [vmem:[%s2387 + $0x90] sm:$0xff]
  %v2407 = vld [vmem:[%s2387 + $0x98] sm:$0xff]
  %v2408 = vld [vmem:[%s2387 + $0xa0] sm:$0xff]
  %v2409 = vld [vmem:[%s2387 + $0xa8] sm:$0xff]
  %v2410 = vld [vmem:[%s2387 + $0xb0] sm:$0xff]
  %v2411 = vld [vmem:[%s2387 + $0xb8] sm:$0xff]
  %v2412 = vld [vmem:[%s2387 + $0xc0] sm:$0xf]
  %v2414 = vsel %vm2022, %v2386, 0
  %v2417 = vsel %vm1915, %v2412, 0
  %2419 = vmatpush.msra.mxu0 %v2403
  %2420 = vmatpush.msra.mxu0 %v2402
  %2421 = vmatpush.msra.mxu0 %v2401
  %2422 = vmatpush.msra.mxu0 %v2400
  %2423 = vmatpush.msra.mxu0 %v2399
  %2424 = vmatpush.msra.mxu0 %v2398
  %2425 = vmatpush.msra.mxu0 %v2397
  %2426 = vmatpush.msra.mxu0 %v2396
  %2427 = vmatpush.msra.mxu0 %v2395
  %2428 = vmatpush.msra.mxu0 %v2394
  %2429 = vmatpush.msra.mxu0 %v2393
  %2430 = vmatpush.msra.mxu0 %v2392
  %2431 = vmatpush.msra.mxu0 %v2391
  %2432 = vmatpush.msra.mxu0 %v2390
  %2433 = vmatpush.msra.mxu0 %v2389
  %2434 = vmatpush.msra.mxu0 %v2388
  %2435 = vmatmul.f32.gmra.mxu0 %v2385
  %v2436 = vpop.f32.mrf.mxu0
  %v2437 = vadd.f32 0.0, %v2436
  %2438 = vdwg.mxu0
  %2439 = vmatpush.msra.mxu0 0.0
  %2440 = vmatpush.msra.mxu0 0.0
  %2441 = vmatpush.msra.mxu0 0.0
  %2442 = vmatpush.msra.mxu0 0.0
  %2443 = vmatpush.msra.mxu0 0.0
  %2444 = vmatpush.msra.mxu0 0.0
  %2445 = vmatpush.msra.mxu0 0.0
  %2446 = vmatpush.msra.mxu0 %v2417
  %2447 = vmatpush.msra.mxu0 %v2411
  %2448 = vmatpush.msra.mxu0 %v2410
  %2449 = vmatpush.msra.mxu0 %v2409
  %2450 = vmatpush.msra.mxu0 %v2408
  %2451 = vmatpush.msra.mxu0 %v2407
  %2452 = vmatpush.msra.mxu0 %v2406
  %2453 = vmatpush.msra.mxu0 %v2405
  %2454 = vmatpush.msra.mxu0 %v2404
  %2455 = vmatmul.f32.gmra.mxu0 %v2414
  %v2456 = vpop.f32.mrf.mxu0
  %v2457 = vadd.f32 %v2437, %v2456
  %2458 = vdwg.mxu0
  %v2459 = vadd.f32 %v2344, %v2457
  %v2460 = vrot.slane %v260, 5
  %v2461 = vrot.slane %v261, 5
  %v2464 = vrot.slane %v489, 4
  %v2465 = vrot.slane %v490, 4
  %v2468 = vrot.slane %v718, 3
  %v2469 = vrot.slane %v719, 3
  %v2472 = vrot.slane %v947, 2
  %v2473 = vrot.slane %v948, 2
  %v2476 = vrot.slane %v1176, 1
  %v2477 = vrot.slane %v1177, 1
  %v2480 = vrot.slane %v1634, 7
  %v2481 = vrot.slane %v1635, 7
  %v2484 = vrot.slane %v1863, 6
  %v2485 = vrot.slane %v1864, 6
  %v2488 = vsel %vm48, %v2460, %v2464
  %v2489 = vsel %vm48, %v2461, %v2465
  %v2490 = vsel %vm1909, %v2488, %v2468
  %v2491 = vsel %vm1909, %v2489, %v2469
  %v2492 = vsel %vm1912, %v2490, %v2472
  %v2493 = vsel %vm1912, %v2491, %v2473
  %v2494 = vsel %vm1915, %v2492, %v2476
  %v2495 = vsel %vm1915, %v2493, %v2477
  %v2496 = vsel %vm1918, %v2494, %v1405
  %v2497 = vsel %vm1918, %v2495, %v1406
  %v2498 = vsel %vm1921, %v2496, %v2480
  %v2499 = vsel %vm1921, %v2497, %v2481
  %v2500 = vsel %vm1924, %v2498, %v2484
  %v2501 = vsel %vm1924, %v2499, %v2485
  %s2502 = scalar_lea.vmem %s3, 1000
  %v2503 = vld [vmem:[%s2502] sm:$0xff]
  %v2504 = vld [vmem:[%s2502 + $0x8] sm:$0xff]
  %v2505 = vld [vmem:[%s2502 + $0x10] sm:$0xff]
  %v2506 = vld [vmem:[%s2502 + $0x18] sm:$0xff]
  %v2507 = vld [vmem:[%s2502 + $0x20] sm:$0xff]
  %v2508 = vld [vmem:[%s2502 + $0x28] sm:$0xff]
  %v2509 = vld [vmem:[%s2502 + $0x30] sm:$0xff]
  %v2510 = vld [vmem:[%s2502 + $0x38] sm:$0xff]
  %v2511 = vld [vmem:[%s2502 + $0x40] sm:$0xff]
  %v2512 = vld [vmem:[%s2502 + $0x48] sm:$0xff]
  %v2513 = vld [vmem:[%s2502 + $0x50] sm:$0xff]
  %v2514 = vld [vmem:[%s2502 + $0x58] sm:$0xff]
  %v2515 = vld [vmem:[%s2502 + $0x60] sm:$0xff]
  %v2516 = vld [vmem:[%s2502 + $0x68] sm:$0xff]
  %v2517 = vld [vmem:[%s2502 + $0x70] sm:$0xff]
  %v2518 = vld [vmem:[%s2502 + $0x78] sm:$0xff]
  %v2519 = vld [vmem:[%s2502 + $0x80] sm:$0xff]
  %v2520 = vld [vmem:[%s2502 + $0x88] sm:$0xff]
  %v2521 = vld [vmem:[%s2502 + $0x90] sm:$0xff]
  %v2522 = vld [vmem:[%s2502 + $0x98] sm:$0xff]
  %v2523 = vld [vmem:[%s2502 + $0xa0] sm:$0xff]
  %v2524 = vld [vmem:[%s2502 + $0xa8] sm:$0xff]
  %v2525 = vld [vmem:[%s2502 + $0xb0] sm:$0xff]
  %v2526 = vld [vmem:[%s2502 + $0xb8] sm:$0xff]
  %v2527 = vld [vmem:[%s2502 + $0xc0] sm:$0xf]
  %v2529 = vsel %vm2022, %v2501, 0
  %v2532 = vsel %vm1915, %v2527, 0
  %2534 = vmatpush.msra.mxu0 %v2518
  %2535 = vmatpush.msra.mxu0 %v2517
  %2536 = vmatpush.msra.mxu0 %v2516
  %2537 = vmatpush.msra.mxu0 %v2515
  %2538 = vmatpush.msra.mxu0 %v2514
  %2539 = vmatpush.msra.mxu0 %v2513
  %2540 = vmatpush.msra.mxu0 %v2512
  %2541 = vmatpush.msra.mxu0 %v2511
  %2542 = vmatpush.msra.mxu0 %v2510
  %2543 = vmatpush.msra.mxu0 %v2509
  %2544 = vmatpush.msra.mxu0 %v2508
  %2545 = vmatpush.msra.mxu0 %v2507
  %2546 = vmatpush.msra.mxu0 %v2506
  %2547 = vmatpush.msra.mxu0 %v2505
  %2548 = vmatpush.msra.mxu0 %v2504
  %2549 = vmatpush.msra.mxu0 %v2503
  %2550 = vmatmul.f32.gmra.mxu0 %v2500
  %v2551 = vpop.f32.mrf.mxu0
  %v2552 = vadd.f32 0.0, %v2551
  %2553 = vdwg.mxu0
  %2554 = vmatpush.msra.mxu0 0.0
  %2555 = vmatpush.msra.mxu0 0.0
  %2556 = vmatpush.msra.mxu0 0.0
  %2557 = vmatpush.msra.mxu0 0.0
  %2558 = vmatpush.msra.mxu0 0.0
  %2559 = vmatpush.msra.mxu0 0.0
  %2560 = vmatpush.msra.mxu0 0.0
  %2561 = vmatpush.msra.mxu0 %v2532
  %2562 = vmatpush.msra.mxu0 %v2526
  %2563 = vmatpush.msra.mxu0 %v2525
  %2564 = vmatpush.msra.mxu0 %v2524
  %2565 = vmatpush.msra.mxu0 %v2523
  %2566 = vmatpush.msra.mxu0 %v2522
  %2567 = vmatpush.msra.mxu0 %v2521
  %2568 = vmatpush.msra.mxu0 %v2520
  %2569 = vmatpush.msra.mxu0 %v2519
  %2570 = vmatmul.f32.gmra.mxu0 %v2529
  %v2571 = vpop.f32.mrf.mxu0
  %v2572 = vadd.f32 %v2552, %v2571
  %2573 = vdwg.mxu0
  %v2574 = vadd.f32 %v2459, %v2572
  %v2575 = vrot.slane %v260, 6
  %v2576 = vrot.slane %v261, 6
  %v2579 = vrot.slane %v489, 5
  %v2580 = vrot.slane %v490, 5
  %v2583 = vrot.slane %v718, 4
  %v2584 = vrot.slane %v719, 4
  %v2587 = vrot.slane %v947, 3
  %v2588 = vrot.slane %v948, 3
  %v2591 = vrot.slane %v1176, 2
  %v2592 = vrot.slane %v1177, 2
  %v2595 = vrot.slane %v1405, 1
  %v2596 = vrot.slane %v1406, 1
  %v2599 = vrot.slane %v1863, 7
  %v2600 = vrot.slane %v1864, 7
  %v2603 = vsel %vm48, %v2575, %v2579
  %v2604 = vsel %vm48, %v2576, %v2580
  %v2605 = vsel %vm1909, %v2603, %v2583
  %v2606 = vsel %vm1909, %v2604, %v2584
  %v2607 = vsel %vm1912, %v2605, %v2587
  %v2608 = vsel %vm1912, %v2606, %v2588
  %v2609 = vsel %vm1915, %v2607, %v2591
  %v2610 = vsel %vm1915, %v2608, %v2592
  %v2611 = vsel %vm1918, %v2609, %v2595
  %v2612 = vsel %vm1918, %v2610, %v2596
  %v2613 = vsel %vm1921, %v2611, %v1634
  %v2614 = vsel %vm1921, %v2612, %v1635
  %v2615 = vsel %vm1924, %v2613, %v2599
  %v2616 = vsel %vm1924, %v2614, %v2600
  %s2617 = scalar_lea.vmem %s3, 1200
  %v2618 = vld [vmem:[%s2617] sm:$0xff]
  %v2619 = vld [vmem:[%s2617 + $0x8] sm:$0xff]
  %v2620 = vld [vmem:[%s2617 + $0x10] sm:$0xff]
  %v2621 = vld [vmem:[%s2617 + $0x18] sm:$0xff]
  %v2622 = vld [vmem:[%s2617 + $0x20] sm:$0xff]
  %v2623 = vld [vmem:[%s2617 + $0x28] sm:$0xff]
  %v2624 = vld [vmem:[%s2617 + $0x30] sm:$0xff]
  %v2625 = vld [vmem:[%s2617 + $0x38] sm:$0xff]
  %v2626 = vld [vmem:[%s2617 + $0x40] sm:$0xff]
  %v2627 = vld [vmem:[%s2617 + $0x48] sm:$0xff]
  %v2628 = vld [vmem:[%s2617 + $0x50] sm:$0xff]
  %v2629 = vld [vmem:[%s2617 + $0x58] sm:$0xff]
  %v2630 = vld [vmem:[%s2617 + $0x60] sm:$0xff]
  %v2631 = vld [vmem:[%s2617 + $0x68] sm:$0xff]
  %v2632 = vld [vmem:[%s2617 + $0x70] sm:$0xff]
  %v2633 = vld [vmem:[%s2617 + $0x78] sm:$0xff]
  %v2634 = vld [vmem:[%s2617 + $0x80] sm:$0xff]
  %v2635 = vld [vmem:[%s2617 + $0x88] sm:$0xff]
  %v2636 = vld [vmem:[%s2617 + $0x90] sm:$0xff]
  %v2637 = vld [vmem:[%s2617 + $0x98] sm:$0xff]
  %v2638 = vld [vmem:[%s2617 + $0xa0] sm:$0xff]
  %v2639 = vld [vmem:[%s2617 + $0xa8] sm:$0xff]
  %v2640 = vld [vmem:[%s2617 + $0xb0] sm:$0xff]
  %v2641 = vld [vmem:[%s2617 + $0xb8] sm:$0xff]
  %v2642 = vld [vmem:[%s2617 + $0xc0] sm:$0xf]
  %v2644 = vsel %vm2022, %v2616, 0
  %v2647 = vsel %vm1915, %v2642, 0
  %2649 = vmatpush.msra.mxu0 %v2633
  %2650 = vmatpush.msra.mxu0 %v2632
  %2651 = vmatpush.msra.mxu0 %v2631
  %2652 = vmatpush.msra.mxu0 %v2630
  %2653 = vmatpush.msra.mxu0 %v2629
  %2654 = vmatpush.msra.mxu0 %v2628
  %2655 = vmatpush.msra.mxu0 %v2627
  %2656 = vmatpush.msra.mxu0 %v2626
  %2657 = vmatpush.msra.mxu0 %v2625
  %2658 = vmatpush.msra.mxu0 %v2624
  %2659 = vmatpush.msra.mxu0 %v2623
  %2660 = vmatpush.msra.mxu0 %v2622
  %2661 = vmatpush.msra.mxu0 %v2621
  %2662 = vmatpush.msra.mxu0 %v2620
  %2663 = vmatpush.msra.mxu0 %v2619
  %2664 = vmatpush.msra.mxu0 %v2618
  %2665 = vmatmul.f32.gmra.mxu0 %v2615
  %v2666 = vpop.f32.mrf.mxu0
  %v2667 = vadd.f32 0.0, %v2666
  %2668 = vdwg.mxu0
  %2669 = vmatpush.msra.mxu0 0.0
  %2670 = vmatpush.msra.mxu0 0.0
  %2671 = vmatpush.msra.mxu0 0.0
  %2672 = vmatpush.msra.mxu0 0.0
  %2673 = vmatpush.msra.mxu0 0.0
  %2674 = vmatpush.msra.mxu0 0.0
  %2675 = vmatpush.msra.mxu0 0.0
  %2676 = vmatpush.msra.mxu0 %v2647
  %2677 = vmatpush.msra.mxu0 %v2641
  %2678 = vmatpush.msra.mxu0 %v2640
  %2679 = vmatpush.msra.mxu0 %v2639
  %2680 = vmatpush.msra.mxu0 %v2638
  %2681 = vmatpush.msra.mxu0 %v2637
  %2682 = vmatpush.msra.mxu0 %v2636
  %2683 = vmatpush.msra.mxu0 %v2635
  %2684 = vmatpush.msra.mxu0 %v2634
  %2685 = vmatmul.f32.gmra.mxu0 %v2644
  %v2686 = vpop.f32.mrf.mxu0
  %v2687 = vadd.f32 %v2667, %v2686
  %2688 = vdwg.mxu0
  %v2689 = vadd.f32 %v2574, %v2687
  %v2690 = vrot.slane %v260, 7
  %v2691 = vrot.slane %v261, 7
  %v2694 = vrot.slane %v489, 6
  %v2695 = vrot.slane %v490, 6
  %v2698 = vrot.slane %v718, 5
  %v2699 = vrot.slane %v719, 5
  %v2702 = vrot.slane %v947, 4
  %v2703 = vrot.slane %v948, 4
  %v2706 = vrot.slane %v1176, 3
  %v2707 = vrot.slane %v1177, 3
  %v2710 = vrot.slane %v1405, 2
  %v2711 = vrot.slane %v1406, 2
  %v2714 = vrot.slane %v1634, 1
  %v2715 = vrot.slane %v1635, 1
  %v2718 = vsel %vm48, %v2690, %v2694
  %v2719 = vsel %vm48, %v2691, %v2695
  %v2720 = vsel %vm1909, %v2718, %v2698
  %v2721 = vsel %vm1909, %v2719, %v2699
  %v2722 = vsel %vm1912, %v2720, %v2702
  %v2723 = vsel %vm1912, %v2721, %v2703
  %v2724 = vsel %vm1915, %v2722, %v2706
  %v2725 = vsel %vm1915, %v2723, %v2707
  %v2726 = vsel %vm1918, %v2724, %v2710
  %v2727 = vsel %vm1918, %v2725, %v2711
  %v2728 = vsel %vm1921, %v2726, %v2714
  %v2729 = vsel %vm1921, %v2727, %v2715
  %v2730 = vsel %vm1924, %v2728, %v1863
  %v2731 = vsel %vm1924, %v2729, %v1864
  %s2732 = scalar_lea.vmem %s3, 1400
  %v2733 = vld [vmem:[%s2732] sm:$0xff]
  %v2734 = vld [vmem:[%s2732 + $0x8] sm:$0xff]
  %v2735 = vld [vmem:[%s2732 + $0x10] sm:$0xff]
  %v2736 = vld [vmem:[%s2732 + $0x18] sm:$0xff]
  %v2737 = vld [vmem:[%s2732 + $0x20] sm:$0xff]
  %v2738 = vld [vmem:[%s2732 + $0x28] sm:$0xff]
  %v2739 = vld [vmem:[%s2732 + $0x30] sm:$0xff]
  %v2740 = vld [vmem:[%s2732 + $0x38] sm:$0xff]
  %v2741 = vld [vmem:[%s2732 + $0x40] sm:$0xff]
  %v2742 = vld [vmem:[%s2732 + $0x48] sm:$0xff]
  %v2743 = vld [vmem:[%s2732 + $0x50] sm:$0xff]
  %v2744 = vld [vmem:[%s2732 + $0x58] sm:$0xff]
  %v2745 = vld [vmem:[%s2732 + $0x60] sm:$0xff]
  %v2746 = vld [vmem:[%s2732 + $0x68] sm:$0xff]
  %v2747 = vld [vmem:[%s2732 + $0x70] sm:$0xff]
  %v2748 = vld [vmem:[%s2732 + $0x78] sm:$0xff]
  %v2749 = vld [vmem:[%s2732 + $0x80] sm:$0xff]
  %v2750 = vld [vmem:[%s2732 + $0x88] sm:$0xff]
  %v2751 = vld [vmem:[%s2732 + $0x90] sm:$0xff]
  %v2752 = vld [vmem:[%s2732 + $0x98] sm:$0xff]
  %v2753 = vld [vmem:[%s2732 + $0xa0] sm:$0xff]
  %v2754 = vld [vmem:[%s2732 + $0xa8] sm:$0xff]
  %v2755 = vld [vmem:[%s2732 + $0xb0] sm:$0xff]
  %v2756 = vld [vmem:[%s2732 + $0xb8] sm:$0xff]
  %v2757 = vld [vmem:[%s2732 + $0xc0] sm:$0xf]
  %v2759 = vsel %vm2022, %v2731, 0
  %v2762 = vsel %vm1915, %v2757, 0
  %2764 = vmatpush.msra.mxu0 %v2748
  %2765 = vmatpush.msra.mxu0 %v2747
  %2766 = vmatpush.msra.mxu0 %v2746
  %2767 = vmatpush.msra.mxu0 %v2745
  %2768 = vmatpush.msra.mxu0 %v2744
  %2769 = vmatpush.msra.mxu0 %v2743
  %2770 = vmatpush.msra.mxu0 %v2742
  %2771 = vmatpush.msra.mxu0 %v2741
  %2772 = vmatpush.msra.mxu0 %v2740
  %2773 = vmatpush.msra.mxu0 %v2739
  %2774 = vmatpush.msra.mxu0 %v2738
  %2775 = vmatpush.msra.mxu0 %v2737
  %2776 = vmatpush.msra.mxu0 %v2736
  %2777 = vmatpush.msra.mxu0 %v2735
  %2778 = vmatpush.msra.mxu0 %v2734
  %2779 = vmatpush.msra.mxu0 %v2733
  %2780 = vmatmul.f32.gmra.mxu0 %v2730
  %v2781 = vpop.f32.mrf.mxu0
  %v2782 = vadd.f32 0.0, %v2781
  %2783 = vdwg.mxu0
  %2784 = vmatpush.msra.mxu0 0.0
  %2785 = vmatpush.msra.mxu0 0.0
  %2786 = vmatpush.msra.mxu0 0.0
  %2787 = vmatpush.msra.mxu0 0.0
  %2788 = vmatpush.msra.mxu0 0.0
  %2789 = vmatpush.msra.mxu0 0.0
  %2790 = vmatpush.msra.mxu0 0.0
  %2791 = vmatpush.msra.mxu0 %v2762
  %2792 = vmatpush.msra.mxu0 %v2756
  %2793 = vmatpush.msra.mxu0 %v2755
  %2794 = vmatpush.msra.mxu0 %v2754
  %2795 = vmatpush.msra.mxu0 %v2753
  %2796 = vmatpush.msra.mxu0 %v2752
  %2797 = vmatpush.msra.mxu0 %v2751
  %2798 = vmatpush.msra.mxu0 %v2750
  %2799 = vmatpush.msra.mxu0 %v2749
  %2800 = vmatmul.f32.gmra.mxu0 %v2759
  %v2801 = vpop.f32.mrf.mxu0
  %v2802 = vadd.f32 %v2782, %v2801
  %2803 = vdwg.mxu0
  %v2804 = vadd.f32 %v2689, %v2802
  %v2805 = vld [vmem:[%s4] sm:$0x1]
  %v2807 = vperm.slane %v2805, 0
  %v2809 = vadd.f32 %v2804, %v2807
  %vm2810 = vcmask 80896
  %2811 = vst.msk [vmem:[%s5] sm:$0xff] %vm2810, %v2809
  // Predicated region
  $region22: #{convnet_forward.1} parent=0 // pred_check
    _
  $region23: #{convnet_forward.1} parent=0 // pred_check_branch
    %2813 = sbr.rel (0) target = $region25
  $region24: #{convnet_forward.1} parent=0 // pred_region
    _
  $region25: #{convnet_forward.1} parent=0 // pred_fallthru
    _
  // Predicated region
  $region26: #{convnet_forward.1} parent=0 // pred_check
    _
  $region27: #{convnet_forward.1} parent=0 // pred_check_branch
    %2815 = sbr.rel (0) target = $region29
  $region28: #{convnet_forward.1} parent=0 // pred_region
    _
  $region29: #{convnet_forward.1} parent=0 // pred_fallthru
    _

</llo_original>
